<compile_context>
chip_gen: v7x
topology: tpu7x:2x2x1
jax: 0.10.0
libtpu: 0.0.40
codegen_flags: <defaults>
</compile_context>

<pallas_src>
import jax
import jax.numpy as jnp
import numpy as np
from jax.experimental import pallas as pl
from jax.experimental.pallas import tpu as pltpu


def _make_kernel(K):
    """Kernel for K interaction inputs, operating on P-row-packed (lane-dense) tiles."""

    def kernel(*args):
        inter_refs = args[:K]                    # K x (TMp, P*D) bf16, packed rows
        (wf_ref,                                 # (P*D, P*D) bf16  blockdiag(fc_weight^T)
         avg_ref,                                # (P*D, P*D) f32   blockdiag(ones(D,D)/D)
         g_ref, b_ref,                           # (1, P*D)   f32   LayerNorm gamma/beta
         w1_ref, b1_ref,                         # (P*D, P*H) bf16 / (1, P*H) f32
         w2_ref, b2_ref,                         # (P*H, P*D) bf16 / (1, P*D) f32
         out_ref) = args[K:]

        wf = wf_ref[...]

        # --- softmax over K fused with the weighted sum (one-pass / online) ------
        # fc_weight bias is identical across K -> softmax over K is exactly
        # invariant to it -> omitted (pure VPU savings, same math).
        x0 = inter_refs[0][...]
        lg = jnp.dot(x0, wf, preferred_element_type=jnp.float32)
        m = lg
        e_sum = jnp.ones_like(lg)                # exp(lg - m) == 1
        es_sum = x0.astype(jnp.float32)
        for k in range(1, K):
            x_k = inter_refs[k][...]
            lg = jnp.dot(x_k, wf, preferred_element_type=jnp.float32)
            m_new = jnp.maximum(m, lg)
            a = jnp.exp(m - m_new)
            e = jnp.exp(lg - m_new)
            e_sum = a * e_sum + e
            es_sum = a * es_sum + e * x_k.astype(jnp.float32)
            m = m_new

        x = es_sum * pl.reciprocal(e_sum, approx=True)       # (TMp, P*D) f32, packed

        # --- LayerNorm over each D-lane slab via block-averaging matmul (f32) ----
        avg = avg_ref[...]
        mu = jnp.dot(x, avg, preferred_element_type=jnp.float32)
        d = x - mu
        var = jnp.dot(d * d, avg, preferred_element_type=jnp.float32)
        y = d * jax.lax.rsqrt(var + 1e-5) * g_ref[...] + b_ref[...]

        # --- FFN: Linear(D,H) -> GELU(tanh) -> Linear(H,D), block-diag packed ----
        h = jnp.dot(y.astype(jnp.bfloat16), w1_ref[...],
                    preferred_element_type=jnp.float32) + b1_ref[...]
        h = jax.nn.gelu(h, approximate=True)
        o = jnp.dot(h.astype(jnp.bfloat16), w2_ref[...],
                    preferred_element_type=jnp.float32) + b2_ref[...]

        # Residual + lane-dense (unmasked) store.
        out_ref[...] = (o + x).astype(out_ref.dtype)

    return kernel


def _pick_tile(mp, target=256, min_steps=4):
    """Packed-row tile: <= target, multiple of 8, and (when mp is large enough)
    small enough to yield >= min_steps grid steps (>= 2 steps per TC on v7x)."""
    tm = min(target, mp)
    if mp >= min_steps * 8:
        tm = min(tm, pl.cdiv(mp, min_steps))
    tm = max(8, tm - tm % 8)
    return tm


def interaction_allocation(interactions, params, *, tile_rows=None):
    """interactions: list of (B, L, D) f32 arrays. Returns (B, L, D) f32."""
    K = len(interactions)
    B, L, D = interactions[0].shape
    H = params["w1"].shape[0]
    M = B * L

    # Lane-packing factor: pack P consecutive rows (width D) into one 128-lane row.
    P = 128 // D if 128 % D == 0 else 1
    DP, HP = P * D, P * H

    mp = pl.cdiv(M, P)                                  # packed rows (pre-pad)
    tmp = _pick_tile(mp) if tile_rows is None else tile_rows
    mp_pad = pl.cdiv(mp, tmp) * tmp
    m_pad = mp_pad * P
    grid = (mp_pad // tmp,)

    def prep(x):
        x = x.reshape(M, D)
        if m_pad != M:                                   # zero rows are softmax/LN safe
            x = jnp.pad(x, ((0, m_pad - M), (0, 0)))
        # (m_pad, D) -> (mp_pad, P*D) is a free row-major view; bf16 halves input DMA.
        return x.reshape(mp_pad, DP).astype(jnp.bfloat16)

    flats = [prep(x) for x in interactions]

    eye = jnp.eye(P, dtype=jnp.float32)
    blkdiag = lambda w: jnp.kron(eye, w.astype(jnp.float32))

    wf_blk = blkdiag(params["wf"].T).astype(jnp.bfloat16)               # (DP, DP)
    avg_blk = blkdiag(jnp.full((D, D), 1.0 / D, jnp.float32))           # (DP, DP) f32
    gamma_p = jnp.tile(params["ln_g"].astype(jnp.float32), P).reshape(1, DP)
    beta_p = jnp.tile(params["ln_b"].astype(jnp.float32), P).reshape(1, DP)
    w1_blk = blkdiag(params["w1"].T).astype(jnp.bfloat16)               # (DP, HP)
    b1_p = jnp.tile(params["b1"].astype(jnp.float32), P).reshape(1, HP)
    w2_blk = blkdiag(params["w2"].T).astype(jnp.bfloat16)               # (HP, DP)
    b2_p = jnp.tile(params["b2"].astype(jnp.float32), P).reshape(1, DP)

    row_spec = pl.BlockSpec((tmp, DP), lambda i: (i, 0))
    const = lambda i: (0, 0)

    out = pl.pallas_call(
        _make_kernel(K),
        out_shape=jax.ShapeDtypeStruct((mp_pad, DP), jnp.float32),
        grid_spec=pltpu.PrefetchScalarGridSpec(
            num_scalar_prefetch=0,
            grid=grid,
            in_specs=[row_spec] * K + [
                pl.BlockSpec((DP, DP), const),      # wf blockdiag (bf16)
                pl.BlockSpec((DP, DP), const),      # LN averaging blockdiag (f32)
                pl.BlockSpec((1, DP), const),       # LN gamma
                pl.BlockSpec((1, DP), const),       # LN beta
                pl.BlockSpec((DP, HP), const),      # FFN W1 blockdiag (bf16)
                pl.BlockSpec((1, HP), const),       # FFN b1
                pl.BlockSpec((HP, DP), const),      # FFN W2 blockdiag (bf16)
                pl.BlockSpec((1, DP), const),       # FFN b2
            ],
            out_specs=pl.BlockSpec((tmp, DP), lambda i: (i, 0)),
        ),
        compiler_params=pltpu.CompilerParams(
            dimension_semantics=("parallel",)),
    )(*flats, wf_blk, avg_blk, gamma_p, beta_p, w1_blk, b1_p, w2_blk, b2_p)

    # (mp_pad, P*D) -> (m_pad, D) is the inverse free view; drop padding rows.
    return out.reshape(m_pad, D)[:M].reshape(B, L, D)


def _reference(interactions, params):
    """Pure-JAX reference matching the PyTorch forward (f32, exact GELU)."""
    stack = jnp.stack(interactions, axis=-1)                  # (B, L, D, K)
    stack_bk = jnp.transpose(stack, (0, 3, 1, 2))             # (B, K, L, D)
    logits = jnp.einsum("bkld,ed->bkle", stack_bk, params["wf"]) + params["bf"]
    logits = jnp.transpose(logits, (0, 2, 3, 1))              # (B, L, D, K)
    weights = jax.nn.softmax(logits, axis=-1)
    x = jnp.sum(weights * stack, axis=-1)                     # (B, L, D)
    mu = jnp.mean(x, axis=-1, keepdims=True)
    var = jnp.mean((x - mu) ** 2, axis=-1, keepdims=True)
    y = (x - mu) / jnp.sqrt(var + 1e-5) * params["ln_g"] + params["ln_b"]
    h = jax.nn.gelu(y @ params["w1"].T + params["b1"], approximate=False)
    o = h @ params["w2"].T + params["b2"]
    return o + x


if __name__ == "__main__":
    # Small deterministic problem: 3 interaction tensors of shape (B, L, D).
    # M = B*L = 1024, D = 32 -> packed rows = 256, packed tile = 64 -> grid of 4
    # parallel steps (>= 2 steps per TC on v7x; pipelined on v5e/v6e).
    B, L, D, K = 2, 512, 32, 3
    mlp_ratio = 2
    H = D * mlp_ratio

    key = jax.random.PRNGKey(0)
    keys = jax.random.split(key, 16)
    interactions = [
        jax.random.normal(keys[i], (B, L, D), dtype=jnp.float32) for i in range(K)
    ]

    # Deterministic parameter init (synthetic; not a checkpoint).
    params = {
        "wf": jax.random.normal(keys[4], (D, D), jnp.float32) * 0.05,
        "bf": jax.random.normal(keys[5], (D,), jnp.float32) * 0.01,
        "ln_g": jnp.ones((D,), jnp.float32),
        "ln_b": jnp.zeros((D,), jnp.float32),
        "w1": jax.random.normal(keys[6], (H, D), jnp.float32) * 0.05,
        "b1": jax.random.normal(keys[7], (H,), jnp.float32) * 0.01,
        "w2": jax.random.normal(keys[8], (D, H), jnp.float32) * 0.05,
        "b2": jax.random.normal(keys[9], (D,), jnp.float32) * 0.01,
    }

    out = jax.block_until_ready(interaction_allocation(interactions, params))
    ref = jax.block_until_ready(_reference(interactions, params))

    # Tolerance covers bf16 inputs / bf16 matmul operands, approx reciprocal and
    # tanh-GELU vs the f32 / erf reference.
    np.testing.assert_allclose(np.asarray(out), np.asarray(ref), rtol=2e-2, atol=2e-2)

    print("KERNEL_OK")
</pallas_src>

<mosaic_0001>
module attributes {stable_mosaic.version = 11 : i64} {
  func.func @kernel(%arg0: i32, %arg1: memref<64x128xbf16, #tpu.memory_space<vmem>>, %arg2: memref<64x128xbf16, #tpu.memory_space<vmem>>, %arg3: memref<64x128xbf16, #tpu.memory_space<vmem>>, %arg4: memref<128x128xbf16, #tpu.memory_space<vmem>>, %arg5: memref<128x128xf32, #tpu.memory_space<vmem>>, %arg6: memref<1x128xf32, #tpu.memory_space<vmem>>, %arg7: memref<1x128xf32, #tpu.memory_space<vmem>>, %arg8: memref<128x256xbf16, #tpu.memory_space<vmem>>, %arg9: memref<1x256xf32, #tpu.memory_space<vmem>>, %arg10: memref<256x128xbf16, #tpu.memory_space<vmem>>, %arg11: memref<1x128xf32, #tpu.memory_space<vmem>>, %arg12: memref<64x128xf32, #tpu.memory_space<vmem>>) attributes {dimension_semantics = [#tpu.dimension_semantics<parallel>], iteration_bounds = array<i64: 4>, scalar_prefetch = 0 : i64, scratch_operands = 0 : i64, tpu.core_type = #tpu.core_type<tc>, window_params = [{transform_indices = @transform_0, window_bounds = array<i64: 64, 128>}, {transform_indices = @transform_1, window_bounds = array<i64: 64, 128>}, {transform_indices = @transform_2, window_bounds = array<i64: 64, 128>}, {pipeline_mode = #tpu.pipeline_mode<synchronous>, transform_indices = @transform_3, window_bounds = array<i64: 128, 128>}, {pipeline_mode = #tpu.pipeline_mode<synchronous>, transform_indices = @transform_4, window_bounds = array<i64: 128, 128>}, {pipeline_mode = #tpu.pipeline_mode<synchronous>, transform_indices = @transform_5, window_bounds = array<i64: 1, 128>}, {pipeline_mode = #tpu.pipeline_mode<synchronous>, transform_indices = @transform_6, window_bounds = array<i64: 1, 128>}, {pipeline_mode = #tpu.pipeline_mode<synchronous>, transform_indices = @transform_7, window_bounds = array<i64: 128, 256>}, {pipeline_mode = #tpu.pipeline_mode<synchronous>, transform_indices = @transform_8, window_bounds = array<i64: 1, 256>}, {pipeline_mode = #tpu.pipeline_mode<synchronous>, transform_indices = @transform_9, window_bounds = array<i64: 256, 128>}, {pipeline_mode = #tpu.pipeline_mode<synchronous>, transform_indices = @transform_10, window_bounds = array<i64: 1, 128>}, {transform_indices = @transform_11, window_bounds = array<i64: 64, 128>}]} {
    %c0 = arith.constant 0 : index
    %c0_0 = arith.constant 0 : index
    %0 = vector.load %arg4[%c0, %c0_0] : memref<128x128xbf16, #tpu.memory_space<vmem>>, vector<128x128xbf16>
    %c0_1 = arith.constant 0 : index
    %c0_2 = arith.constant 0 : index
    %1 = vector.load %arg1[%c0_1, %c0_2] : memref<64x128xbf16, #tpu.memory_space<vmem>>, vector<64x128xbf16>
    %cst = arith.constant dense<0.000000e+00> : vector<64x128xf32>
    %2 = tpu.matmul %1, %0, %cst {dimension_numbers = #tpu.dot_dimension_numbers<[1], [0], [0], [1], [0, 0, 1, 1], [], []>} : vector<64x128xbf16>, vector<128x128xbf16>, vector<64x128xf32> -> vector<64x128xf32>
    %cst_3 = arith.constant 1.000000e+00 : f32
    %3 = vector.broadcast %cst_3 : f32 to vector<64x128xf32>
    %4 = arith.extf %1 : vector<64x128xbf16> to vector<64x128xf32>
    %c0_4 = arith.constant 0 : index
    %c0_5 = arith.constant 0 : index
    %5 = vector.load %arg2[%c0_4, %c0_5] : memref<64x128xbf16, #tpu.memory_space<vmem>>, vector<64x128xbf16>
    %cst_6 = arith.constant dense<0.000000e+00> : vector<64x128xf32>
    %6 = tpu.matmul %5, %0, %cst_6 {dimension_numbers = #tpu.dot_dimension_numbers<[1], [0], [0], [1], [0, 0, 1, 1], [], []>} : vector<64x128xbf16>, vector<128x128xbf16>, vector<64x128xf32> -> vector<64x128xf32>
    %7 = arith.maximumf %2, %6 : vector<64x128xf32>
    %8 = arith.subf %2, %7 : vector<64x128xf32>
    %9 = math.exp %8 : vector<64x128xf32>
    %10 = arith.subf %6, %7 : vector<64x128xf32>
    %11 = math.exp %10 : vector<64x128xf32>
    %12 = arith.mulf %9, %3 : vector<64x128xf32>
    %13 = arith.addf %12, %11 : vector<64x128xf32>
    %14 = arith.mulf %9, %4 : vector<64x128xf32>
    %15 = arith.extf %5 : vector<64x128xbf16> to vector<64x128xf32>
    %16 = arith.mulf %11, %15 : vector<64x128xf32>
    %17 = arith.addf %14, %16 : vector<64x128xf32>
    %c0_7 = arith.constant 0 : index
    %c0_8 = arith.constant 0 : index
    %18 = vector.load %arg3[%c0_7, %c0_8] : memref<64x128xbf16, #tpu.memory_space<vmem>>, vector<64x128xbf16>
    %cst_9 = arith.constant dense<0.000000e+00> : vector<64x128xf32>
    %19 = tpu.matmul %18, %0, %cst_9 {dimension_numbers = #tpu.dot_dimension_numbers<[1], [0], [0], [1], [0, 0, 1, 1], [], []>} : vector<64x128xbf16>, vector<128x128xbf16>, vector<64x128xf32> -> vector<64x128xf32>
    %20 = arith.maximumf %7, %19 : vector<64x128xf32>
    %21 = arith.subf %7, %20 : vector<64x128xf32>
    %22 = math.exp %21 : vector<64x128xf32>
    %23 = arith.subf %19, %20 : vector<64x128xf32>
    %24 = math.exp %23 : vector<64x128xf32>
    %25 = arith.mulf %22, %13 : vector<64x128xf32>
    %26 = arith.addf %25, %24 : vector<64x128xf32>
    %27 = arith.mulf %22, %17 : vector<64x128xf32>
    %28 = arith.extf %18 : vector<64x128xbf16> to vector<64x128xf32>
    %29 = arith.mulf %24, %28 : vector<64x128xf32>
    %30 = arith.addf %27, %29 : vector<64x128xf32>
    %31 = tpu.reciprocal %26 {approx = true} : vector<64x128xf32> -> vector<64x128xf32>
    %32 = arith.mulf %30, %31 : vector<64x128xf32>
    %c0_10 = arith.constant 0 : index
    %c0_11 = arith.constant 0 : index
    %33 = vector.load %arg5[%c0_10, %c0_11] : memref<128x128xf32, #tpu.memory_space<vmem>>, vector<128x128xf32>
    %cst_12 = arith.constant dense<0.000000e+00> : vector<64x128xf32>
    %34 = tpu.matmul %32, %33, %cst_12 {dimension_numbers = #tpu.dot_dimension_numbers<[1], [0], [0], [1], [0, 0, 1, 1], [], []>} : vector<64x128xf32>, vector<128x128xf32>, vector<64x128xf32> -> vector<64x128xf32>
    %35 = arith.subf %32, %34 : vector<64x128xf32>
    %36 = arith.mulf %35, %35 : vector<64x128xf32>
    %cst_13 = arith.constant dense<0.000000e+00> : vector<64x128xf32>
    %37 = tpu.matmul %36, %33, %cst_13 {dimension_numbers = #tpu.dot_dimension_numbers<[1], [0], [0], [1], [0, 0, 1, 1], [], []>} : vector<64x128xf32>, vector<128x128xf32>, vector<64x128xf32> -> vector<64x128xf32>
    %cst_14 = arith.constant 9.99999974E-6 : f32
    %38 = vector.broadcast %cst_14 : f32 to vector<64x128xf32>
    %39 = arith.addf %37, %38 : vector<64x128xf32>
    %40 = math.rsqrt %39 : vector<64x128xf32>
    %41 = arith.mulf %35, %40 : vector<64x128xf32>
    %c0_15 = arith.constant 0 : index
    %c0_16 = arith.constant 0 : index
    %42 = vector.load %arg6[%c0_15, %c0_16] : memref<1x128xf32, #tpu.memory_space<vmem>>, vector<1x128xf32>
    %43 = vector.broadcast %42 : vector<1x128xf32> to vector<64x128xf32>
    %44 = arith.mulf %41, %43 : vector<64x128xf32>
    %c0_17 = arith.constant 0 : index
    %c0_18 = arith.constant 0 : index
    %45 = vector.load %arg7[%c0_17, %c0_18] : memref<1x128xf32, #tpu.memory_space<vmem>>, vector<1x128xf32>
    %46 = vector.broadcast %45 : vector<1x128xf32> to vector<64x128xf32>
    %47 = arith.addf %44, %46 : vector<64x128xf32>
    %48 = arith.truncf %47 : vector<64x128xf32> to vector<64x128xbf16>
    %c0_19 = arith.constant 0 : index
    %c0_20 = arith.constant 0 : index
    %49 = vector.load %arg8[%c0_19, %c0_20] : memref<128x256xbf16, #tpu.memory_space<vmem>>, vector<128x256xbf16>
    %cst_21 = arith.constant dense<0.000000e+00> : vector<64x256xf32>
    %50 = tpu.matmul %48, %49, %cst_21 {dimension_numbers = #tpu.dot_dimension_numbers<[1], [0], [0], [1], [0, 0, 1, 1], [], []>} : vector<64x128xbf16>, vector<128x256xbf16>, vector<64x256xf32> -> vector<64x256xf32>
    %c0_22 = arith.constant 0 : index
    %c0_23 = arith.constant 0 : index
    %51 = vector.load %arg9[%c0_22, %c0_23] : memref<1x256xf32, #tpu.memory_space<vmem>>, vector<1x256xf32>
    %52 = vector.broadcast %51 : vector<1x256xf32> to vector<64x256xf32>
    %53 = arith.addf %50, %52 : vector<64x256xf32>
    %54 = arith.mulf %53, %53 : vector<64x256xf32>
    %55 = arith.mulf %53, %54 : vector<64x256xf32>
    %cst_24 = arith.constant 4.471500e-02 : f32
    %56 = vector.broadcast %cst_24 : f32 to vector<64x256xf32>
    %57 = arith.mulf %56, %55 : vector<64x256xf32>
    %58 = arith.addf %53, %57 : vector<64x256xf32>
    %cst_25 = arith.constant 0.797884583 : f32
    %59 = vector.broadcast %cst_25 : f32 to vector<64x256xf32>
    %60 = arith.mulf %59, %58 : vector<64x256xf32>
    %61 = math.tanh %60 : vector<64x256xf32>
    %cst_26 = arith.constant 1.000000e+00 : f32
    %62 = vector.broadcast %cst_26 : f32 to vector<64x256xf32>
    %63 = arith.addf %62, %61 : vector<64x256xf32>
    %cst_27 = arith.constant 5.000000e-01 : f32
    %64 = vector.broadcast %cst_27 : f32 to vector<64x256xf32>
    %65 = arith.mulf %64, %63 : vector<64x256xf32>
    %66 = arith.mulf %53, %65 : vector<64x256xf32>
    %67 = arith.truncf %66 : vector<64x256xf32> to vector<64x256xbf16>
    %c0_28 = arith.constant 0 : index
    %c0_29 = arith.constant 0 : index
    %68 = vector.load %arg10[%c0_28, %c0_29] : memref<256x128xbf16, #tpu.memory_space<vmem>>, vector<256x128xbf16>
    %cst_30 = arith.constant dense<0.000000e+00> : vector<64x128xf32>
    %69 = tpu.matmul %67, %68, %cst_30 {dimension_numbers = #tpu.dot_dimension_numbers<[1], [0], [0], [1], [0, 0, 1, 1], [], []>} : vector<64x256xbf16>, vector<256x128xbf16>, vector<64x128xf32> -> vector<64x128xf32>
    %c0_31 = arith.constant 0 : index
    %c0_32 = arith.constant 0 : index
    %70 = vector.load %arg11[%c0_31, %c0_32] : memref<1x128xf32, #tpu.memory_space<vmem>>, vector<1x128xf32>
    %71 = vector.broadcast %70 : vector<1x128xf32> to vector<64x128xf32>
    %72 = arith.addf %69, %71 : vector<64x128xf32>
    %73 = arith.addf %72, %32 : vector<64x128xf32>
    %c0_33 = arith.constant 0 : index
    %c0_34 = arith.constant 0 : index
    %74 = vector.load %arg12[%c0_33, %c0_34] : memref<64x128xf32, #tpu.memory_space<vmem>>, vector<64x128xf32>
    tpu.vector_store %arg12[%c0_33, %c0_34], %73 {strides = array<i32>} : memref<64x128xf32, #tpu.memory_space<vmem>>, vector<64x128xf32>,
    return
  }
  func.func @transform_0(%arg0: i32) -> (i32, i32) {
    %c0_i32 = arith.constant 0 : i32
    %c0_i32_0 = arith.constant 0 : i32
    return %arg0, %c0_i32 : i32, i32
  }
  func.func @transform_1(%arg0: i32) -> (i32, i32) {
    %c0_i32 = arith.constant 0 : i32
    %c0_i32_0 = arith.constant 0 : i32
    return %arg0, %c0_i32 : i32, i32
  }
  func.func @transform_2(%arg0: i32) -> (i32, i32) {
    %c0_i32 = arith.constant 0 : i32
    %c0_i32_0 = arith.constant 0 : i32
    return %arg0, %c0_i32 : i32, i32
  }
  func.func @transform_3(%arg0: i32) -> (i32, i32) {
    %c0_i32 = arith.constant 0 : i32
    %c0_i32_0 = arith.constant 0 : i32
    %c0_i32_1 = arith.constant 0 : i32
    return %c0_i32, %c0_i32_0 : i32, i32
  }
  func.func @transform_4(%arg0: i32) -> (i32, i32) {
    %c0_i32 = arith.constant 0 : i32
    %c0_i32_0 = arith.constant 0 : i32
    %c0_i32_1 = arith.constant 0 : i32
    return %c0_i32, %c0_i32_0 : i32, i32
  }
  func.func @transform_5(%arg0: i32) -> (i32, i32) {
    %c0_i32 = arith.constant 0 : i32
    %c0_i32_0 = arith.constant 0 : i32
    %c0_i32_1 = arith.constant 0 : i32
    return %c0_i32, %c0_i32_0 : i32, i32
  }
  func.func @transform_6(%arg0: i32) -> (i32, i32) {
    %c0_i32 = arith.constant 0 : i32
    %c0_i32_0 = arith.constant 0 : i32
    %c0_i32_1 = arith.constant 0 : i32
    return %c0_i32, %c0_i32_0 : i32, i32
  }
  func.func @transform_7(%arg0: i32) -> (i32, i32) {
    %c0_i32 = arith.constant 0 : i32
    %c0_i32_0 = arith.constant 0 : i32
    %c0_i32_1 = arith.constant 0 : i32
    return %c0_i32, %c0_i32_0 : i32, i32
  }
  func.func @transform_8(%arg0: i32) -> (i32, i32) {
    %c0_i32 = arith.constant 0 : i32
    %c0_i32_0 = arith.constant 0 : i32
    %c0_i32_1 = arith.constant 0 : i32
    return %c0_i32, %c0_i32_0 : i32, i32
  }
  func.func @transform_9(%arg0: i32) -> (i32, i32) {
    %c0_i32 = arith.constant 0 : i32
    %c0_i32_0 = arith.constant 0 : i32
    %c0_i32_1 = arith.constant 0 : i32
    return %c0_i32, %c0_i32_0 : i32, i32
  }
  func.func @transform_10(%arg0: i32) -> (i32, i32) {
    %c0_i32 = arith.constant 0 : i32
    %c0_i32_0 = arith.constant 0 : i32
    %c0_i32_1 = arith.constant 0 : i32
    return %c0_i32, %c0_i32_0 : i32, i32
  }
  func.func @transform_11(%arg0: i32) -> (i32, i32) {
    %c0_i32 = arith.constant 0 : i32
    %c0_i32_0 = arith.constant 0 : i32
    return %arg0, %c0_i32 : i32, i32
  }
}

</mosaic_0001>

<llo_original>
// kernel: tpu_custom_call.1
$region0: #{tpu_custom_call.1}
  #allocation0 [shape = 'u32[]', space=smem, size = 0x4, offset = 0x4, fixed_abs, tag = 'smem constant byte address 0x4 - core index']
  #allocation1 [shape = 'u32[144,128]{1,0:T(1,128)}', space=vmem, size = 0x12000, scoped, tag = 'internal scratch']
  %s0 = inlined_call_operand.hbm [shape: bf16[256,128], index: 0, kind: input, shape index: {}]
  %s1 = inlined_call_operand.hbm [shape: bf16[256,128], index: 1, kind: input, shape index: {}]
  %s2 = inlined_call_operand.hbm [shape: bf16[256,128], index: 2, kind: input, shape index: {}]
  %s3 = inlined_call_operand.hbm [shape: bf16[128,128], index: 3, kind: input, shape index: {}]
  %s4 = inlined_call_operand.hbm [shape: f32[128,128], index: 4, kind: input, shape index: {}]
  %s5 = inlined_call_operand.vmem [shape: f32[1,128], index: 5, kind: input, shape index: {}]
  %s6 = inlined_call_operand.vmem [shape: f32[1,128], index: 6, kind: input, shape index: {}]
  %s7 = inlined_call_operand.hbm [shape: bf16[128,256], index: 7, kind: input, shape index: {}]
  %s8 = inlined_call_operand.vmem [shape: f32[1,256], index: 8, kind: input, shape index: {}]
  %s9 = inlined_call_operand.hbm [shape: bf16[256,128], index: 9, kind: input, shape index: {}]
  %s10 = inlined_call_operand.vmem [shape: f32[1,128], index: 10, kind: input, shape index: {}]
  %s11 = inlined_call_operand.hbm [shape: f32[256,128], index: 11, kind: output, shape index: {}]
  %s12 = sld [smem:[#allocation0]]
  $region105: #{tpu_custom_call.1} parent=0
    _
  %s14 = ssub.s32 1, %s12
  %s15 = scalar_select 0, %s14, %s12
  $region1: #{tpu_custom_call.1} parent=0
    #allocation2 [shape = 'u8[32768]{0}', space=vmem, size = 0x8000, scoped, tag = 'input window, operand 0']
    #allocation3 [shape = 's32[2]{0}', space=sflag, size = 0x8, scoped, tag = 'scoped memory for tpu_custom_call.1']
    #allocation4 [shape = 's32[2]{0}', space=sflag, size = 0x8, scoped, tag = 'scoped memory for tpu_custom_call.1']
    #allocation5 [shape = 'u8[32768]{0}', space=vmem, size = 0x8000, scoped, tag = 'input window, operand 1']
    #allocation6 [shape = 's32[2]{0}', space=sflag, size = 0x8, scoped, tag = 'scoped memory for tpu_custom_call.1']
    #allocation7 [shape = 'u8[32768]{0}', space=vmem, size = 0x8000, scoped, tag = 'input window, operand 2']
    #allocation8 [shape = 'u8[32768]{0}', space=vmem, size = 0x8000, scoped, tag = 'input window, operand 3, single buffered']
    #allocation9 [shape = 's32[1]{0}', space=sflag, size = 0x4, scoped, tag = 'scoped memory for tpu_custom_call.1']
    #allocation10 [shape = 'u8[65536]{0}', space=vmem, size = 0x10000, scoped, tag = 'input window, operand 4, single buffered']
    #allocation11 [shape = 'u8[65536]{0}', space=vmem, size = 0x10000, scoped, tag = 'input window, operand 7, single buffered']
    #allocation12 [shape = 's32[1]{0}', space=sflag, size = 0x4, scoped, tag = 'scoped memory for tpu_custom_call.1']
    #allocation13 [shape = 'u8[65536]{0}', space=vmem, size = 0x10000, scoped, tag = 'input window, operand 9, single buffered']
    #allocation14 [shape = 'u8[65536]{0}', space=vmem, size = 0x10000, scoped, tag = 'output window, operand 0']
    %16 = vsyncpa [#allocation3], 0
    %s17 = scalar_lea.sflag [#allocation3], 1
    %18 = vsyncpa %s17, 0
    %19 = vsyncpa [#allocation6], 0
    %s20 = scalar_lea.sflag [#allocation6], 1
    %21 = vsyncpa %s20, 0
    %22 = vsyncpa [#allocation9], 0
    %23 = vsyncpa [#allocation12], 0
    %24 = vsyncpa [#allocation4], 0
    %s25 = scalar_lea.sflag [#allocation4], 1
    %26 = vsyncpa %s25, 0
    loop: start=0, step=1, limit=6
    $region2: #{tpu_custom_call.1} parent=1 // loop_pre_header
      _
    $region3: #{tpu_custom_call.1} parent=1 // loop_header
      %s28 = sphi 0, %s32
      %p29 = scmp.ge.s32.totalorder %s28, 6
      %s38 = sphi 0, %s40
      %s41 = sphi 0, %s38
      %s42 = sphi 0, %s41
      %s58 = sphi 0, %s42
      %s64 = sphi 0, %s66
      %s67 = sphi 0, %s64
      %s68 = sphi 0, %s67
      %s84 = sphi 0, %s68
      %s90 = sphi 0, %s92
      %s93 = sphi 0, %s90
      %s94 = sphi 0, %s93
      %s110 = sphi 0, %s94
      %s114 = sphi 0, %s114
      %s116 = sphi 0, %s114
      %s117 = sphi 0, %s116
      %s131 = sphi 0, %s117
      %s135 = sphi 0, %s135
      %s137 = sphi 0, %s135
      %s138 = sphi 0, %s137
      %s152 = sphi 0, %s138
      %s156 = sphi 0, %s156
      %s158 = sphi 0, %s156
      %s159 = sphi 0, %s158
      %s173 = sphi 0, %s159
      %s177 = sphi 0, %s177
      %s179 = sphi 0, %s177
      %s180 = sphi 0, %s179
      %s194 = sphi 0, %s180
      %s198 = sphi 0, %s198
      %s200 = sphi 0, %s198
      %s201 = sphi 0, %s200
      %s215 = sphi 0, %s201
      %s219 = sphi 0, %s219
      %s221 = sphi 0, %s219
      %s222 = sphi 0, %s221
      %s236 = sphi 0, %s222
      %s240 = sphi 0, %s240
      %s242 = sphi 0, %s240
      %s243 = sphi 0, %s242
      %s257 = sphi 0, %s243
      %s261 = sphi 0, %s261
      %s263 = sphi 0, %s261
      %s264 = sphi 0, %s263
      %s278 = sphi 0, %s264
      %s284 = sphi 0, %s286
      %s287 = sphi 0, %s284
      %s288 = sphi 0, %s287
      %s304 = sphi 0, %s288
    $region4: #{tpu_custom_call.1} parent=1 // loop_header_branch
      %31 = sbr.rel (%p29) target = $region8
    $region5: #{tpu_custom_call.1} parent=1 // loop_body
      %s33 = ssub.s32 %s28, 1
      %s34 = ssub.s32 %s28, 2
      %s35 = sadd.s32 %s28, 1
      %s36 = ssub.s32 %s28, %s35
      %p37 = scmp.eq.s32.totalorder %s36, 0
      %s39 = sadd.s32 %s38, 1
      %s40 = scalar_select %p37, %s38, %s39
      %p43 = pneg %p37
      %p44 = scmp.eq.s32.totalorder %s28, 3
      %p45 = por %p43, %p44
      %p46 = scmp.ne.s32.totalorder %s38, %s41
      %p47 = scmp.eq.s32.totalorder %s28, 0
      %p48 = por %p46, %p47
      %p49 = scmp.ne.s32.totalorder %s38, %s41
      %p50 = scmp.eq.s32.totalorder %s33, 3
      %p51 = por %p49, %p50
      %p52 = scmp.ne.s32.totalorder %s41, %s42
      %p53 = scmp.eq.s32.totalorder %s33, 0
      %p54 = por %p52, %p53
      %p55 = scmp.ne.s32.totalorder %s41, %s42
      %p56 = scmp.eq.s32.totalorder %s34, 3
      %p57 = por %p55, %p56
      %p59 = scmp.ne.s32.totalorder %s42, %s58
      %p60 = scmp.eq.s32.totalorder %s34, 0
      %p61 = por %p59, %p60
      %s62 = ssub.s32 %s28, %s35
      %p63 = scmp.eq.s32.totalorder %s62, 0
      %s65 = sadd.s32 %s64, 1
      %s66 = scalar_select %p63, %s64, %s65
      %p69 = pneg %p63
      %p70 = scmp.eq.s32.totalorder %s28, 3
      %p71 = por %p69, %p70
      %p72 = scmp.ne.s32.totalorder %s64, %s67
      %p73 = scmp.eq.s32.totalorder %s28, 0
      %p74 = por %p72, %p73
      %p75 = scmp.ne.s32.totalorder %s64, %s67
      %p76 = scmp.eq.s32.totalorder %s33, 3
      %p77 = por %p75, %p76
      %p78 = scmp.ne.s32.totalorder %s67, %s68
      %p79 = scmp.eq.s32.totalorder %s33, 0
      %p80 = por %p78, %p79
      %p81 = scmp.ne.s32.totalorder %s67, %s68
      %p82 = scmp.eq.s32.totalorder %s34, 3
      %p83 = por %p81, %p82
      %p85 = scmp.ne.s32.totalorder %s68, %s84
      %p86 = scmp.eq.s32.totalorder %s34, 0
      %p87 = por %p85, %p86
      %s88 = ssub.s32 %s28, %s35
      %p89 = scmp.eq.s32.totalorder %s88, 0
      %s91 = sadd.s32 %s90, 1
      %s92 = scalar_select %p89, %s90, %s91
      %p95 = pneg %p89
      %p96 = scmp.eq.s32.totalorder %s28, 3
      %p97 = por %p95, %p96
      %p98 = scmp.ne.s32.totalorder %s90, %s93
      %p99 = scmp.eq.s32.totalorder %s28, 0
      %p100 = por %p98, %p99
      %p101 = scmp.ne.s32.totalorder %s90, %s93
      %p102 = scmp.eq.s32.totalorder %s33, 3
      %p103 = por %p101, %p102
      %p104 = scmp.ne.s32.totalorder %s93, %s94
      %p105 = scmp.eq.s32.totalorder %s33, 0
      %p106 = por %p104, %p105
      %p107 = scmp.ne.s32.totalorder %s93, %s94
      %p108 = scmp.eq.s32.totalorder %s34, 3
      %p109 = por %p107, %p108
      %p111 = scmp.ne.s32.totalorder %s94, %s110
      %p112 = scmp.eq.s32.totalorder %s34, 0
      %p113 = por %p111, %p112
      %s115 = sadd.s32 %s114, 1
      %p118 = scmp.eq.s32.totalorder %s28, 3
      %p119 = scmp.ne.s32.totalorder %s114, %s116
      %p120 = scmp.eq.s32.totalorder %s28, 0
      %p121 = por %p119, %p120
      %p122 = scmp.ne.s32.totalorder %s114, %s116
      %p123 = scmp.eq.s32.totalorder %s33, 3
      %p124 = por %p122, %p123
      %p125 = scmp.ne.s32.totalorder %s116, %s117
      %p126 = scmp.eq.s32.totalorder %s33, 0
      %p127 = por %p125, %p126
      %p128 = scmp.ne.s32.totalorder %s116, %s117
      %p129 = scmp.eq.s32.totalorder %s34, 3
      %p130 = por %p128, %p129
      %p132 = scmp.ne.s32.totalorder %s117, %s131
      %p133 = scmp.eq.s32.totalorder %s34, 0
      %p134 = por %p132, %p133
      %s136 = sadd.s32 %s135, 1
      %p139 = scmp.eq.s32.totalorder %s28, 3
      %p140 = scmp.ne.s32.totalorder %s135, %s137
      %p141 = scmp.eq.s32.totalorder %s28, 0
      %p142 = por %p140, %p141
      %p143 = scmp.ne.s32.totalorder %s135, %s137
      %p144 = scmp.eq.s32.totalorder %s33, 3
      %p145 = por %p143, %p144
      %p146 = scmp.ne.s32.totalorder %s137, %s138
      %p147 = scmp.eq.s32.totalorder %s33, 0
      %p148 = por %p146, %p147
      %p149 = scmp.ne.s32.totalorder %s137, %s138
      %p150 = scmp.eq.s32.totalorder %s34, 3
      %p151 = por %p149, %p150
      %p153 = scmp.ne.s32.totalorder %s138, %s152
      %p154 = scmp.eq.s32.totalorder %s34, 0
      %p155 = por %p153, %p154
      %s157 = sadd.s32 %s156, 1
      %p160 = scmp.eq.s32.totalorder %s28, 3
      %p161 = scmp.ne.s32.totalorder %s156, %s158
      %p162 = scmp.eq.s32.totalorder %s28, 0
      %p163 = por %p161, %p162
      %p164 = scmp.ne.s32.totalorder %s156, %s158
      %p165 = scmp.eq.s32.totalorder %s33, 3
      %p166 = por %p164, %p165
      %p167 = scmp.ne.s32.totalorder %s158, %s159
      %p168 = scmp.eq.s32.totalorder %s33, 0
      %p169 = por %p167, %p168
      %p170 = scmp.ne.s32.totalorder %s158, %s159
      %p171 = scmp.eq.s32.totalorder %s34, 3
      %p172 = por %p170, %p171
      %p174 = scmp.ne.s32.totalorder %s159, %s173
      %p175 = scmp.eq.s32.totalorder %s34, 0
      %p176 = por %p174, %p175
      %s178 = sadd.s32 %s177, 1
      %p181 = scmp.eq.s32.totalorder %s28, 3
      %p182 = scmp.ne.s32.totalorder %s177, %s179
      %p183 = scmp.eq.s32.totalorder %s28, 0
      %p184 = por %p182, %p183
      %p185 = scmp.ne.s32.totalorder %s177, %s179
      %p186 = scmp.eq.s32.totalorder %s33, 3
      %p187 = por %p185, %p186
      %p188 = scmp.ne.s32.totalorder %s179, %s180
      %p189 = scmp.eq.s32.totalorder %s33, 0
      %p190 = por %p188, %p189
      %p191 = scmp.ne.s32.totalorder %s179, %s180
      %p192 = scmp.eq.s32.totalorder %s34, 3
      %p193 = por %p191, %p192
      %p195 = scmp.ne.s32.totalorder %s180, %s194
      %p196 = scmp.eq.s32.totalorder %s34, 0
      %p197 = por %p195, %p196
      %s199 = sadd.s32 %s198, 1
      %p202 = scmp.eq.s32.totalorder %s28, 3
      %p203 = scmp.ne.s32.totalorder %s198, %s200
      %p204 = scmp.eq.s32.totalorder %s28, 0
      %p205 = por %p203, %p204
      %p206 = scmp.ne.s32.totalorder %s198, %s200
      %p207 = scmp.eq.s32.totalorder %s33, 3
      %p208 = por %p206, %p207
      %p209 = scmp.ne.s32.totalorder %s200, %s201
      %p210 = scmp.eq.s32.totalorder %s33, 0
      %p211 = por %p209, %p210
      %p212 = scmp.ne.s32.totalorder %s200, %s201
      %p213 = scmp.eq.s32.totalorder %s34, 3
      %p214 = por %p212, %p213
      %p216 = scmp.ne.s32.totalorder %s201, %s215
      %p217 = scmp.eq.s32.totalorder %s34, 0
      %p218 = por %p216, %p217
      %s220 = sadd.s32 %s219, 1
      %p223 = scmp.eq.s32.totalorder %s28, 3
      %p224 = scmp.ne.s32.totalorder %s219, %s221
      %p225 = scmp.eq.s32.totalorder %s28, 0
      %p226 = por %p224, %p225
      %p227 = scmp.ne.s32.totalorder %s219, %s221
      %p228 = scmp.eq.s32.totalorder %s33, 3
      %p229 = por %p227, %p228
      %p230 = scmp.ne.s32.totalorder %s221, %s222
      %p231 = scmp.eq.s32.totalorder %s33, 0
      %p232 = por %p230, %p231
      %p233 = scmp.ne.s32.totalorder %s221, %s222
      %p234 = scmp.eq.s32.totalorder %s34, 3
      %p235 = por %p233, %p234
      %p237 = scmp.ne.s32.totalorder %s222, %s236
      %p238 = scmp.eq.s32.totalorder %s34, 0
      %p239 = por %p237, %p238
      %s241 = sadd.s32 %s240, 1
      %p244 = scmp.eq.s32.totalorder %s28, 3
      %p245 = scmp.ne.s32.totalorder %s240, %s242
      %p246 = scmp.eq.s32.totalorder %s28, 0
      %p247 = por %p245, %p246
      %p248 = scmp.ne.s32.totalorder %s240, %s242
      %p249 = scmp.eq.s32.totalorder %s33, 3
      %p250 = por %p248, %p249
      %p251 = scmp.ne.s32.totalorder %s242, %s243
      %p252 = scmp.eq.s32.totalorder %s33, 0
      %p253 = por %p251, %p252
      %p254 = scmp.ne.s32.totalorder %s242, %s243
      %p255 = scmp.eq.s32.totalorder %s34, 3
      %p256 = por %p254, %p255
      %p258 = scmp.ne.s32.totalorder %s243, %s257
      %p259 = scmp.eq.s32.totalorder %s34, 0
      %p260 = por %p258, %p259
      %s262 = sadd.s32 %s261, 1
      %p265 = scmp.eq.s32.totalorder %s28, 3
      %p266 = scmp.ne.s32.totalorder %s261, %s263
      %p267 = scmp.eq.s32.totalorder %s28, 0
      %p268 = por %p266, %p267
      %p269 = scmp.ne.s32.totalorder %s261, %s263
      %p270 = scmp.eq.s32.totalorder %s33, 3
      %p271 = por %p269, %p270
      %p272 = scmp.ne.s32.totalorder %s263, %s264
      %p273 = scmp.eq.s32.totalorder %s33, 0
      %p274 = por %p272, %p273
      %p275 = scmp.ne.s32.totalorder %s263, %s264
      %p276 = scmp.eq.s32.totalorder %s34, 3
      %p277 = por %p275, %p276
      %p279 = scmp.ne.s32.totalorder %s264, %s278
      %p280 = scmp.eq.s32.totalorder %s34, 0
      %p281 = por %p279, %p280
      %s282 = ssub.s32 %s28, %s35
      %p283 = scmp.eq.s32.totalorder %s282, 0
      %s285 = sadd.s32 %s284, 1
      %s286 = scalar_select %p283, %s284, %s285
      %p289 = pneg %p283
      %p290 = scmp.eq.s32.totalorder %s28, 3
      %p291 = por %p289, %p290
      %p292 = scmp.ne.s32.totalorder %s284, %s287
      %p293 = scmp.eq.s32.totalorder %s28, 0
      %p294 = por %p292, %p293
      %p295 = scmp.ne.s32.totalorder %s284, %s287
      %p296 = scmp.eq.s32.totalorder %s33, 3
      %p297 = por %p295, %p296
      %p298 = scmp.ne.s32.totalorder %s287, %s288
      %p299 = scmp.eq.s32.totalorder %s33, 0
      %p300 = por %p298, %p299
      %p301 = scmp.ne.s32.totalorder %s287, %s288
      %p302 = scmp.eq.s32.totalorder %s34, 3
      %p303 = por %p301, %p302
      %p305 = scmp.ne.s32.totalorder %s288, %s304
      %p306 = scmp.eq.s32.totalorder %s34, 0
      %p307 = por %p305, %p306
      %p308 = scmp.le.s32.totalorder 1, %s28
      %p309 = scmp.lt.s32.totalorder %s28, 5
      %p310 = pnand %p308, %p309
      %p311 = pneg %p310
      // Predicated region
      $region9: #{tpu_custom_call.1} parent=5 // pred_check
        _
      $region10: #{tpu_custom_call.1} parent=5 // pred_check_branch
        %313 = sbr.rel (%p310) target = $region12
      $region11: #{tpu_custom_call.1} parent=5 // pred_region
        %s314 = ssub.s32 %s28, 1
        // Predicated region
        $region13: #{tpu_custom_call.1} parent=11 // pred_check
          %p315 = pneg %p127
        $region14: #{tpu_custom_call.1} parent=11 // pred_check_branch
          %317 = sbr.rel (%p315) target = $region16
        $region15: #{tpu_custom_call.1} parent=11 // pred_region
          %s319 = ssub.s32 1024, 1024
          %320 = vsyncadd [#allocation9], %s319
          %s321 = sshll.u32 [#allocation8], 4
          %s322 = int_to_ptr.vmem [resolvable:$true] %s321
          %327 = dma.hbm_to_vmem [thread:$0]  %s3, 1024, %s322, [#allocation9], 64, 64, 4
        $region16: #{tpu_custom_call.1} parent=11 // pred_fallthru
          _
        // Predicated region
        $region17: #{tpu_custom_call.1} parent=11 // pred_check
          %p328 = pneg %p148
        $region18: #{tpu_custom_call.1} parent=11 // pred_check_branch
          %330 = sbr.rel (%p328) target = $region20
        $region19: #{tpu_custom_call.1} parent=11 // pred_region
          %s332 = ssub.s32 2048, 2048
          %333 = vsyncadd [#allocation9], %s332
          %s334 = sshll.u32 [#allocation10], 4
          %s335 = int_to_ptr.vmem [resolvable:$true] %s334
          %340 = dma.hbm_to_vmem [thread:$0]  %s4, 2048, %s335, [#allocation9], 128, 128, 8
        $region20: #{tpu_custom_call.1} parent=11 // pred_fallthru
          _
        // Predicated region
        $region21: #{tpu_custom_call.1} parent=11 // pred_check
          %p341 = pneg %p169
        $region22: #{tpu_custom_call.1} parent=11 // pred_check_branch
          %343 = sbr.rel (%p341) target = $region24
        $region23: #{tpu_custom_call.1} parent=11 // pred_region
          _
        $region24: #{tpu_custom_call.1} parent=11 // pred_fallthru
          _
        // Predicated region
        $region25: #{tpu_custom_call.1} parent=11 // pred_check
          %p344 = pneg %p190
        $region26: #{tpu_custom_call.1} parent=11 // pred_check_branch
          %346 = sbr.rel (%p344) target = $region28
        $region27: #{tpu_custom_call.1} parent=11 // pred_region
          _
        $region28: #{tpu_custom_call.1} parent=11 // pred_fallthru
          _
        // Predicated region
        $region29: #{tpu_custom_call.1} parent=11 // pred_check
          %p347 = pneg %p211
        $region30: #{tpu_custom_call.1} parent=11 // pred_check_branch
          %349 = sbr.rel (%p347) target = $region32
        $region31: #{tpu_custom_call.1} parent=11 // pred_region
          %s351 = ssub.s32 2048, 2048
          %352 = vsyncadd [#allocation12], %s351
          %s353 = sshll.u32 [#allocation11], 4
          %s354 = int_to_ptr.vmem [resolvable:$true] %s353
          %359 = dma.hbm_to_vmem [thread:$0]  %s7, 2048, %s354, [#allocation12], 128, 128, 8
        $region32: #{tpu_custom_call.1} parent=11 // pred_fallthru
          _
        // Predicated region
        $region33: #{tpu_custom_call.1} parent=11 // pred_check
          %p360 = pneg %p232
        $region34: #{tpu_custom_call.1} parent=11 // pred_check_branch
          %362 = sbr.rel (%p360) target = $region36
        $region35: #{tpu_custom_call.1} parent=11 // pred_region
          _
        $region36: #{tpu_custom_call.1} parent=11 // pred_fallthru
          _
        // Predicated region
        $region37: #{tpu_custom_call.1} parent=11 // pred_check
          %p363 = pneg %p253
        $region38: #{tpu_custom_call.1} parent=11 // pred_check_branch
          %365 = sbr.rel (%p363) target = $region40
        $region39: #{tpu_custom_call.1} parent=11 // pred_region
          %s367 = ssub.s32 2048, 2048
          %368 = vsyncadd [#allocation12], %s367
          %s369 = sshll.u32 [#allocation13], 4
          %s370 = int_to_ptr.vmem [resolvable:$true] %s369
          %375 = dma.hbm_to_vmem [thread:$0]  %s9, 2048, %s370, [#allocation12], 64, 64, 4
        $region40: #{tpu_custom_call.1} parent=11 // pred_fallthru
          _
        // Predicated region
        $region41: #{tpu_custom_call.1} parent=11 // pred_check
          %p376 = pneg %p274
        $region42: #{tpu_custom_call.1} parent=11 // pred_check_branch
          %378 = sbr.rel (%p376) target = $region44
        $region43: #{tpu_custom_call.1} parent=11 // pred_region
          _
        $region44: #{tpu_custom_call.1} parent=11 // pred_fallthru
          _
      $region12: #{tpu_custom_call.1} parent=5 // pred_fallthru
        _
      %p379 = scmp.lt.s32.totalorder %s28, 4
      // Predicated region
      $region45: #{tpu_custom_call.1} parent=5 // pred_check
        %p380 = pneg %p379
      $region46: #{tpu_custom_call.1} parent=5 // pred_check_branch
        %382 = sbr.rel (%p380) target = $region48
      $region47: #{tpu_custom_call.1} parent=5 // pred_region
        // Predicated region
        $region49: #{tpu_custom_call.1} parent=47 // pred_check
          %p383 = pneg %p48
        $region50: #{tpu_custom_call.1} parent=47 // pred_check_branch
          %385 = sbr.rel (%p383) target = $region52
        $region51: #{tpu_custom_call.1} parent=47 // pred_region
          %s386 = sand.u32 %s38, 1
          %s387 = scalar_lea.sflag [#allocation3], %s386
          %s388 = sand.u32 %s38, 1
          %s389 = smul.addr %s388, 32
          %s390 = scalar_lea.vmem [#allocation2], %s389
          %s391 = smul.u32 8, %s28
          %s393 = ssub.s32 512, 512
          %394 = vsyncadd %s387, %s393
          %s395 = smul.addr %s391, 64
          %s396 = scalar_lea.hbm %s0, %s395
          %s397 = sshll.u32 %s390, 4
          %s398 = int_to_ptr.vmem [resolvable:$true] %s397
          %403 = dma.hbm_to_vmem [thread:$0]  %s396, 512, %s398, %s387, 64, 64, 4
        $region52: #{tpu_custom_call.1} parent=47 // pred_fallthru
          _
        // Predicated region
        $region53: #{tpu_custom_call.1} parent=47 // pred_check
          %p404 = pneg %p74
        $region54: #{tpu_custom_call.1} parent=47 // pred_check_branch
          %406 = sbr.rel (%p404) target = $region56
        $region55: #{tpu_custom_call.1} parent=47 // pred_region
          %s407 = sand.u32 %s28, 1
          %s408 = scalar_lea.sflag [#allocation6], %s407
          %s409 = sand.u32 %s64, 1
          %s410 = smul.addr %s409, 32
          %s411 = scalar_lea.vmem [#allocation5], %s410
          %s412 = smul.u32 8, %s28
          %s414 = ssub.s32 512, 512
          %415 = vsyncadd %s408, %s414
          %s416 = smul.addr %s412, 64
          %s417 = scalar_lea.hbm %s1, %s416
          %s418 = sshll.u32 %s411, 4
          %s419 = int_to_ptr.vmem [resolvable:$true] %s418
          %424 = dma.hbm_to_vmem [thread:$0]  %s417, 512, %s419, %s408, 64, 64, 4
        $region56: #{tpu_custom_call.1} parent=47 // pred_fallthru
          _
        // Predicated region
        $region57: #{tpu_custom_call.1} parent=47 // pred_check
          %p425 = pneg %p100
        $region58: #{tpu_custom_call.1} parent=47 // pred_check_branch
          %427 = sbr.rel (%p425) target = $region60
        $region59: #{tpu_custom_call.1} parent=47 // pred_region
          %s428 = sand.u32 %s28, 1
          %s429 = scalar_lea.sflag [#allocation6], %s428
          %s430 = sand.u32 %s90, 1
          %s431 = smul.addr %s430, 32
          %s432 = scalar_lea.vmem [#allocation7], %s431
          %s433 = smul.u32 8, %s28
          %s435 = ssub.s32 512, 512
          %436 = vsyncadd %s429, %s435
          %s437 = smul.addr %s433, 64
          %s438 = scalar_lea.hbm %s2, %s437
          %s439 = sshll.u32 %s432, 4
          %s440 = int_to_ptr.vmem [resolvable:$true] %s439
          %445 = dma.hbm_to_vmem [thread:$0]  %s438, 512, %s440, %s429, 64, 64, 4
        $region60: #{tpu_custom_call.1} parent=47 // pred_fallthru
          _
      $region48: #{tpu_custom_call.1} parent=5 // pred_fallthru
        _
      %p446 = scmp.le.s32.totalorder 1, %s28
      %p447 = scmp.lt.s32.totalorder %s28, 5
      %p448 = pnand %p446, %p447
      %p449 = pneg %p448
      // Predicated region
      $region61: #{tpu_custom_call.1} parent=5 // pred_check
        _
      $region62: #{tpu_custom_call.1} parent=5 // pred_check_branch
        %451 = sbr.rel (%p448) target = $region64
      $region63: #{tpu_custom_call.1} parent=5 // pred_region
        %s452 = ssub.s32 %s28, 1
        %s453 = sand.u32 %s41, 1
        %s454 = scalar_lea.sflag [#allocation3], %s453
        %s455 = sand.u32 %s41, 1
        %s456 = smul.addr %s455, 32
        %s457 = scalar_lea.vmem [#allocation2], %s456
        // Predicated region
        $region65: #{tpu_custom_call.1} parent=63 // pred_check
          %p458 = pneg %p54
        $region66: #{tpu_custom_call.1} parent=63 // pred_check_branch
          %460 = sbr.rel (%p458) target = $region68
        $region67: #{tpu_custom_call.1} parent=63 // pred_region
          %461 = dma.done %s454, 512
        $region68: #{tpu_custom_call.1} parent=63 // pred_fallthru
          _
        %s462 = sand.u32 %s33, 1
        %s463 = scalar_lea.sflag [#allocation6], %s462
        %s464 = sand.u32 %s67, 1
        %s465 = smul.addr %s464, 32
        %s466 = scalar_lea.vmem [#allocation5], %s465
        // Predicated region
        $region69: #{tpu_custom_call.1} parent=63 // pred_check
          %p467 = pneg %p80
        $region70: #{tpu_custom_call.1} parent=63 // pred_check_branch
          %469 = sbr.rel (%p467) target = $region72
        $region71: #{tpu_custom_call.1} parent=63 // pred_region
          %470 = dma.done %s463, 512
        $region72: #{tpu_custom_call.1} parent=63 // pred_fallthru
          _
        %s471 = sand.u32 %s33, 1
        %s472 = scalar_lea.sflag [#allocation6], %s471
        %s473 = sand.u32 %s93, 1
        %s474 = smul.addr %s473, 32
        %s475 = scalar_lea.vmem [#allocation7], %s474
        // Predicated region
        $region73: #{tpu_custom_call.1} parent=63 // pred_check
          %p476 = pneg %p106
        $region74: #{tpu_custom_call.1} parent=63 // pred_check_branch
          %478 = sbr.rel (%p476) target = $region76
        $region75: #{tpu_custom_call.1} parent=63 // pred_region
          %479 = dma.done %s472, 512
        $region76: #{tpu_custom_call.1} parent=63 // pred_fallthru
          _
        // Predicated region
        $region77: #{tpu_custom_call.1} parent=63 // pred_check
          %p480 = pneg %p127
        $region78: #{tpu_custom_call.1} parent=63 // pred_check_branch
          %482 = sbr.rel (%p480) target = $region80
        $region79: #{tpu_custom_call.1} parent=63 // pred_region
          %483 = dma.done [#allocation9], 1024
        $region80: #{tpu_custom_call.1} parent=63 // pred_fallthru
          _
        // Predicated region
        $region81: #{tpu_custom_call.1} parent=63 // pred_check
          %p484 = pneg %p148
        $region82: #{tpu_custom_call.1} parent=63 // pred_check_branch
          %486 = sbr.rel (%p484) target = $region84
        $region83: #{tpu_custom_call.1} parent=63 // pred_region
          %487 = dma.done [#allocation9], 2048
        $region84: #{tpu_custom_call.1} parent=63 // pred_fallthru
          _
        // Predicated region
        $region85: #{tpu_custom_call.1} parent=63 // pred_check
          %p488 = pneg %p211
        $region86: #{tpu_custom_call.1} parent=63 // pred_check_branch
          %490 = sbr.rel (%p488) target = $region88
        $region87: #{tpu_custom_call.1} parent=63 // pred_region
          %491 = dma.done [#allocation12], 2048
        $region88: #{tpu_custom_call.1} parent=63 // pred_fallthru
          _
        // Predicated region
        $region89: #{tpu_custom_call.1} parent=63 // pred_check
          %p492 = pneg %p253
        $region90: #{tpu_custom_call.1} parent=63 // pred_check_branch
          %494 = sbr.rel (%p492) target = $region92
        $region91: #{tpu_custom_call.1} parent=63 // pred_region
          %495 = dma.done [#allocation12], 2048
        $region92: #{tpu_custom_call.1} parent=63 // pred_fallthru
          _
        %s496 = sand.u32 %s41, 1
        %s497 = scalar_lea.sflag [#allocation3], %s496
        %s498 = sand.u32 %s41, 1
        %s499 = smul.addr %s498, 32
        %s500 = scalar_lea.vmem [#allocation2], %s499
        %p501 = pneg %p54
        %p502 = pneg %p51
        %s503 = sand.u32 %s33, 1
        %s504 = scalar_lea.sflag [#allocation6], %s503
        %s505 = sand.u32 %s67, 1
        %s506 = smul.addr %s505, 32
        %s507 = scalar_lea.vmem [#allocation5], %s506
        %p508 = pneg %p80
        %p509 = pneg %p77
        %s510 = sand.u32 %s33, 1
        %s511 = scalar_lea.sflag [#allocation6], %s510
        %s512 = sand.u32 %s93, 1
        %s513 = smul.addr %s512, 32
        %s514 = scalar_lea.vmem [#allocation7], %s513
        %p515 = pneg %p106
        %p516 = pneg %p103
        %p517 = pneg %p127
        %p518 = pneg %p124
        %p519 = pneg %p148
        %p520 = pneg %p145
        %p521 = pneg %p169
        %p522 = pneg %p166
        %p523 = pneg %p190
        %p524 = pneg %p187
        %p525 = pneg %p211
        %p526 = pneg %p208
        %p527 = pneg %p232
        %p528 = pneg %p229
        %p529 = pneg %p253
        %p530 = pneg %p250
        %p531 = pneg %p274
        %p532 = pneg %p271
        %p533 = pneg %p300
        %p534 = pneg %p297
        %s535 = sand.u32 %s287, 1
        %s536 = scalar_lea.sflag [#allocation4], %s535
        %s537 = sand.u32 %s287, 1
        %s538 = smul.addr %s537, 64
        %s539 = scalar_lea.vmem [#allocation14], %s538
        %s540 = smul.u32 8, %s33
        %s541 = smul.u32 8, %s33
        %s542 = smul.u32 8, %s33
        %s543 = smul.u32 8, %s33
        %v545 = vld [vmem:[#allocation8] sm:$0xf]
        %v546 = vld [vmem:[#allocation8 + $0x4] sm:$0xf]
        %v547 = vld [vmem:[#allocation8 + $0x8] sm:$0xf]
        %v548 = vld [vmem:[#allocation8 + $0xc] sm:$0xf]
        %v549 = vld [vmem:[#allocation8 + $0x10] sm:$0xf]
        %v550 = vld [vmem:[#allocation8 + $0x14] sm:$0xf]
        %v551 = vld [vmem:[#allocation8 + $0x18] sm:$0xf]
        %v552 = vld [vmem:[#allocation8 + $0x1c] sm:$0xf]
        %v553 = vld [vmem:[#allocation8 + $0x20] sm:$0xf]
        %v554 = vld [vmem:[#allocation8 + $0x24] sm:$0xf]
        %v555 = vld [vmem:[#allocation8 + $0x28] sm:$0xf]
        %v556 = vld [vmem:[#allocation8 + $0x2c] sm:$0xf]
        %v557 = vld [vmem:[#allocation8 + $0x30] sm:$0xf]
        %v558 = vld [vmem:[#allocation8 + $0x34] sm:$0xf]
        %v559 = vld [vmem:[#allocation8 + $0x38] sm:$0xf]
        %v560 = vld [vmem:[#allocation8 + $0x3c] sm:$0xf]
        %v561 = vld [vmem:[%s457] sm:$0xf]
        %v562 = vld [vmem:[%s457 + $0x4] sm:$0xf]
        %v563 = vld [vmem:[%s457 + $0x8] sm:$0xf]
        %v564 = vld [vmem:[%s457 + $0xc] sm:$0xf]
        %v565 = vld [vmem:[%s457 + $0x10] sm:$0xf]
        %v566 = vld [vmem:[%s457 + $0x14] sm:$0xf]
        %v567 = vld [vmem:[%s457 + $0x18] sm:$0xf]
        %v568 = vld [vmem:[%s457 + $0x1c] sm:$0xf]
        %v577 = vunpack.c.l.b16 %v561
        %v578 = vunpack.c.l.b16 %v562
        %v579 = vunpack.c.l.b16 %v563
        %v580 = vunpack.c.l.b16 %v564
        %v581 = vunpack.c.l.b16 %v565
        %v582 = vunpack.c.l.b16 %v566
        %v583 = vunpack.c.l.b16 %v567
        %v584 = vunpack.c.l.b16 %v568
        %v585 = vpack.c.b16 %v578, %v577
        %v586 = vpack.c.b16 %v580, %v579
        %v587 = vpack.c.b16 %v582, %v581
        %v588 = vpack.c.b16 %v584, %v583
        %v609 = vunpack.c.l.b16 %v545
        %v610 = vunpack.c.l.b16 %v546
        %v611 = vunpack.c.l.b16 %v547
        %v612 = vunpack.c.l.b16 %v548
        %v613 = vunpack.c.l.b16 %v549
        %v614 = vunpack.c.l.b16 %v550
        %v615 = vunpack.c.l.b16 %v551
        %v616 = vunpack.c.l.b16 %v552
        %v617 = vunpack.c.l.b16 %v553
        %v618 = vunpack.c.l.b16 %v554
        %v619 = vunpack.c.l.b16 %v555
        %v620 = vunpack.c.l.b16 %v556
        %v621 = vunpack.c.l.b16 %v557
        %v622 = vunpack.c.l.b16 %v558
        %v623 = vunpack.c.l.b16 %v559
        %v624 = vunpack.c.l.b16 %v560
        %v625 = vpack.c.b16 %v610, %v609
        %v626 = vpack.c.b16 %v612, %v611
        %v627 = vpack.c.b16 %v614, %v613
        %v628 = vpack.c.b16 %v616, %v615
        %v629 = vpack.c.b16 %v618, %v617
        %v630 = vpack.c.b16 %v620, %v619
        %v631 = vpack.c.b16 %v622, %v621
        %v632 = vpack.c.b16 %v624, %v623
        %641 = vmatprep.subr.bf16.mxu0 0
        %642 = vmatpush1.bf16.msra.mxu0 %v625
        %643 = vmatprep.subr.bf16.mxu0 0
        %644 = vmatpush1.bf16.msra.mxu0 %v626
        %645 = vmatprep.subr.bf16.mxu0 0
        %646 = vmatpush1.bf16.msra.mxu0 %v627
        %647 = vmatprep.subr.bf16.mxu0 0
        %648 = vmatpush1.bf16.msra.mxu0 %v628
        %649 = vmatprep.subr.bf16.mxu0 0
        %650 = vmatpush1.bf16.msra.mxu0 %v629
        %651 = vmatprep.subr.bf16.mxu0 0
        %652 = vmatpush1.bf16.msra.mxu0 %v630
        %653 = vmatprep.subr.bf16.mxu0 0
        %654 = vmatpush1.bf16.msra.mxu0 %v631
        %655 = vmatprep.subr.bf16.mxu0 0
        %656 = vmatpush1.bf16.msra.mxu0 %v632
        %657 = vmatprep.subr.bf16.mxu0 0
        %658 = vmatpush1.bf16.msra.mxu0 0
        %659 = vmatprep.subr.bf16.mxu0 0
        %660 = vmatpush1.bf16.msra.mxu0 0
        %661 = vmatprep.subr.bf16.mxu0 0
        %662 = vmatpush1.bf16.msra.mxu0 0
        %663 = vmatprep.subr.bf16.mxu0 0
        %664 = vmatpush1.bf16.msra.mxu0 0
        %665 = vmatprep.subr.bf16.mxu0 0
        %666 = vmatpush1.bf16.msra.mxu0 0
        %667 = vmatprep.subr.bf16.mxu0 0
        %668 = vmatpush1.bf16.msra.mxu0 0
        %669 = vmatprep.subr.bf16.mxu0 0
        %670 = vmatpush1.bf16.msra.mxu0 0
        %671 = vmatprep.subr.bf16.mxu0 0
        %672 = vmatpush1.bf16.msra.mxu0 0
        %673 = vmatprep.mubr.bf16.mxu0 0
        %674 = vmatmul.mubr.bf16.gmra.mrb[0].mxu0 %v585
        %v675 = vpop.f32.mrb[0].mxu0
        %v676 = vadd.f32 0.0, %v675
        %v677 = vpop.f32.mrb[0].mxu0
        %v678 = vpop.f32.mrb[0].mxu0
        %v679 = vadd.f32 0.0, %v678
        %v680 = vpop.f32.mrb[0].mxu0
        %681 = vmatprep.mubr.bf16.mxu0 0
        %682 = vmatmul.mubr.bf16.gmra.mrb[0].mxu0 %v586
        %v683 = vpop.f32.mrb[0].mxu0
        %v684 = vadd.f32 0.0, %v683
        %v685 = vpop.f32.mrb[0].mxu0
        %v686 = vpop.f32.mrb[0].mxu0
        %v687 = vadd.f32 0.0, %v686
        %v688 = vpop.f32.mrb[0].mxu0
        %689 = vmatprep.mubr.bf16.mxu0 0
        %690 = vmatmul.mubr.bf16.gmra.mrb[0].mxu0 %v587
        %v691 = vpop.f32.mrb[0].mxu0
        %v692 = vadd.f32 0.0, %v691
        %v693 = vpop.f32.mrb[0].mxu0
        %v694 = vpop.f32.mrb[0].mxu0
        %v695 = vadd.f32 0.0, %v694
        %v696 = vpop.f32.mrb[0].mxu0
        %697 = vmatprep.mubr.bf16.mxu0 0
        %698 = vmatmul.mubr.bf16.gmra.mrb[0].mxu0 %v588
        %v699 = vpop.f32.mrb[0].mxu0
        %v700 = vadd.f32 0.0, %v699
        %v701 = vpop.f32.mrb[0].mxu0
        %v702 = vpop.f32.mrb[0].mxu0
        %v703 = vadd.f32 0.0, %v702
        %v704 = vpop.f32.mrb[0].mxu0
        %705 = vdwg.mxu0
        %v706 = vunpack.c.l.bf16 %v561
        %v707 = vunpack.c.l.bf16 %v562
        %v708 = vunpack.c.l.bf16 %v563
        %v709 = vunpack.c.l.bf16 %v564
        %v710 = vunpack.c.l.bf16 %v565
        %v711 = vunpack.c.l.bf16 %v566
        %v712 = vunpack.c.l.bf16 %v567
        %v713 = vunpack.c.l.bf16 %v568
        %v714 = vld [vmem:[%s466] sm:$0xf]
        %v715 = vld [vmem:[%s466 + $0x4] sm:$0xf]
        %v716 = vld [vmem:[%s466 + $0x8] sm:$0xf]
        %v717 = vld [vmem:[%s466 + $0xc] sm:$0xf]
        %v718 = vld [vmem:[%s466 + $0x10] sm:$0xf]
        %v719 = vld [vmem:[%s466 + $0x14] sm:$0xf]
        %v720 = vld [vmem:[%s466 + $0x18] sm:$0xf]
        %v721 = vld [vmem:[%s466 + $0x1c] sm:$0xf]
        %v730 = vunpack.c.l.b16 %v714
        %v731 = vunpack.c.l.b16 %v715
        %v732 = vunpack.c.l.b16 %v716
        %v733 = vunpack.c.l.b16 %v717
        %v734 = vunpack.c.l.b16 %v718
        %v735 = vunpack.c.l.b16 %v719
        %v736 = vunpack.c.l.b16 %v720
        %v737 = vunpack.c.l.b16 %v721
        %v738 = vpack.c.b16 %v731, %v730
        %v739 = vpack.c.b16 %v733, %v732
        %v740 = vpack.c.b16 %v735, %v734
        %v741 = vpack.c.b16 %v737, %v736
        %746 = vmatprep.subr.bf16.mxu0 0
        %747 = vmatpush1.bf16.msra.mxu0 %v625
        %748 = vmatprep.subr.bf16.mxu0 0
        %749 = vmatpush1.bf16.msra.mxu0 %v626
        %750 = vmatprep.subr.bf16.mxu0 0
        %751 = vmatpush1.bf16.msra.mxu0 %v627
        %752 = vmatprep.subr.bf16.mxu0 0
        %753 = vmatpush1.bf16.msra.mxu0 %v628
        %754 = vmatprep.subr.bf16.mxu0 0
        %755 = vmatpush1.bf16.msra.mxu0 %v629
        %756 = vmatprep.subr.bf16.mxu0 0
        %757 = vmatpush1.bf16.msra.mxu0 %v630
        %758 = vmatprep.subr.bf16.mxu0 0
        %759 = vmatpush1.bf16.msra.mxu0 %v631
        %760 = vmatprep.subr.bf16.mxu0 0
        %761 = vmatpush1.bf16.msra.mxu0 %v632
        %762 = vmatprep.subr.bf16.mxu0 0
        %763 = vmatpush1.bf16.msra.mxu0 0
        %764 = vmatprep.subr.bf16.mxu0 0
        %765 = vmatpush1.bf16.msra.mxu0 0
        %766 = vmatprep.subr.bf16.mxu0 0
        %767 = vmatpush1.bf16.msra.mxu0 0
        %768 = vmatprep.subr.bf16.mxu0 0
        %769 = vmatpush1.bf16.msra.mxu0 0
        %770 = vmatprep.subr.bf16.mxu0 0
        %771 = vmatpush1.bf16.msra.mxu0 0
        %772 = vmatprep.subr.bf16.mxu0 0
        %773 = vmatpush1.bf16.msra.mxu0 0
        %774 = vmatprep.subr.bf16.mxu0 0
        %775 = vmatpush1.bf16.msra.mxu0 0
        %776 = vmatprep.subr.bf16.mxu0 0
        %777 = vmatpush1.bf16.msra.mxu0 0
        %778 = vmatprep.mubr.bf16.mxu0 0
        %779 = vmatmul.mubr.bf16.gmra.mrb[0].mxu0 %v738
        %v780 = vpop.f32.mrb[0].mxu0
        %v781 = vadd.f32 0.0, %v780
        %v782 = vpop.f32.mrb[0].mxu0
        %v783 = vpop.f32.mrb[0].mxu0
        %v784 = vadd.f32 0.0, %v783
        %v785 = vpop.f32.mrb[0].mxu0
        %786 = vmatprep.mubr.bf16.mxu0 0
        %787 = vmatmul.mubr.bf16.gmra.mrb[0].mxu0 %v739
        %v788 = vpop.f32.mrb[0].mxu0
        %v789 = vadd.f32 0.0, %v788
        %v790 = vpop.f32.mrb[0].mxu0
        %v791 = vpop.f32.mrb[0].mxu0
        %v792 = vadd.f32 0.0, %v791
        %v793 = vpop.f32.mrb[0].mxu0
        %794 = vmatprep.mubr.bf16.mxu0 0
        %795 = vmatmul.mubr.bf16.gmra.mrb[0].mxu0 %v740
        %v796 = vpop.f32.mrb[0].mxu0
        %v797 = vadd.f32 0.0, %v796
        %v798 = vpop.f32.mrb[0].mxu0
        %v799 = vpop.f32.mrb[0].mxu0
        %v800 = vadd.f32 0.0, %v799
        %v801 = vpop.f32.mrb[0].mxu0
        %802 = vmatprep.mubr.bf16.mxu0 0
        %803 = vmatmul.mubr.bf16.gmra.mrb[0].mxu0 %v741
        %v804 = vpop.f32.mrb[0].mxu0
        %v805 = vadd.f32 0.0, %v804
        %v806 = vpop.f32.mrb[0].mxu0
        %v807 = vpop.f32.mrb[0].mxu0
        %v808 = vadd.f32 0.0, %v807
        %v809 = vpop.f32.mrb[0].mxu0
        %810 = vdwg.mxu0
        %v811 = vmax.f32 %v676, %v781
        %v812 = vmax.f32 %v679, %v784
        %v813 = vmax.f32 %v684, %v789
        %v814 = vmax.f32 %v687, %v792
        %v815 = vmax.f32 %v692, %v797
        %v816 = vmax.f32 %v695, %v800
        %v817 = vmax.f32 %v700, %v805
        %v818 = vmax.f32 %v703, %v808
        %v819 = vsub.f32 %v676, %v811
        %v820 = vsub.f32 %v679, %v812
        %v821 = vsub.f32 %v684, %v813
        %v822 = vsub.f32 %v687, %v814
        %v823 = vsub.f32 %v692, %v815
        %v824 = vsub.f32 %v695, %v816
        %v825 = vsub.f32 %v700, %v817
        %v826 = vsub.f32 %v703, %v818
        %v827 = vmul.f32 %v819, 1.442695
        %v828 = vpow.pop %v827
        %v829 = vmul.f32 %v820, 1.442695
        %v830 = vpow.pop %v829
        %v831 = vmul.f32 %v821, 1.442695
        %v832 = vpow.pop %v831
        %v833 = vmul.f32 %v822, 1.442695
        %v834 = vpow.pop %v833
        %v835 = vmul.f32 %v823, 1.442695
        %v836 = vpow.pop %v835
        %v837 = vmul.f32 %v824, 1.442695
        %v838 = vpow.pop %v837
        %v839 = vmul.f32 %v825, 1.442695
        %v840 = vpow.pop %v839
        %v841 = vmul.f32 %v826, 1.442695
        %v842 = vpow.pop %v841
        %v843 = vsub.f32 %v781, %v811
        %v844 = vsub.f32 %v784, %v812
        %v845 = vsub.f32 %v789, %v813
        %v846 = vsub.f32 %v792, %v814
        %v847 = vsub.f32 %v797, %v815
        %v848 = vsub.f32 %v800, %v816
        %v849 = vsub.f32 %v805, %v817
        %v850 = vsub.f32 %v808, %v818
        %v851 = vmul.f32 %v843, 1.442695
        %v852 = vpow.pop %v851
        %v853 = vmul.f32 %v844, 1.442695
        %v854 = vpow.pop %v853
        %v855 = vmul.f32 %v845, 1.442695
        %v856 = vpow.pop %v855
        %v857 = vmul.f32 %v846, 1.442695
        %v858 = vpow.pop %v857
        %v859 = vmul.f32 %v847, 1.442695
        %v860 = vpow.pop %v859
        %v861 = vmul.f32 %v848, 1.442695
        %v862 = vpow.pop %v861
        %v863 = vmul.f32 %v849, 1.442695
        %v864 = vpow.pop %v863
        %v865 = vmul.f32 %v850, 1.442695
        %v866 = vpow.pop %v865
        %v867 = vadd.f32 %v828, %v852
        %v868 = vadd.f32 %v830, %v854
        %v869 = vadd.f32 %v832, %v856
        %v870 = vadd.f32 %v834, %v858
        %v871 = vadd.f32 %v836, %v860
        %v872 = vadd.f32 %v838, %v862
        %v873 = vadd.f32 %v840, %v864
        %v874 = vadd.f32 %v842, %v866
        %v875 = vmul.f32 %v828, %v706
        %v876 = vmul.f32 %v830, %v707
        %v877 = vmul.f32 %v832, %v708
        %v878 = vmul.f32 %v834, %v709
        %v879 = vmul.f32 %v836, %v710
        %v880 = vmul.f32 %v838, %v711
        %v881 = vmul.f32 %v840, %v712
        %v882 = vmul.f32 %v842, %v713
        %v883 = vunpack.c.l.bf16 %v714
        %v884 = vunpack.c.l.bf16 %v715
        %v885 = vunpack.c.l.bf16 %v716
        %v886 = vunpack.c.l.bf16 %v717
        %v887 = vunpack.c.l.bf16 %v718
        %v888 = vunpack.c.l.bf16 %v719
        %v889 = vunpack.c.l.bf16 %v720
        %v890 = vunpack.c.l.bf16 %v721
        %v891 = vmul.f32 %v852, %v883
        %v892 = vmul.f32 %v854, %v884
        %v893 = vmul.f32 %v856, %v885
        %v894 = vmul.f32 %v858, %v886
        %v895 = vmul.f32 %v860, %v887
        %v896 = vmul.f32 %v862, %v888
        %v897 = vmul.f32 %v864, %v889
        %v898 = vmul.f32 %v866, %v890
        %v899 = vadd.f32 %v875, %v891
        %v900 = vadd.f32 %v876, %v892
        %v901 = vadd.f32 %v877, %v893
        %v902 = vadd.f32 %v878, %v894
        %v903 = vadd.f32 %v879, %v895
        %v904 = vadd.f32 %v880, %v896
        %v905 = vadd.f32 %v881, %v897
        %v906 = vadd.f32 %v882, %v898
        %v907 = vld [vmem:[%s475] sm:$0xf]
        %v908 = vld [vmem:[%s475 + $0x4] sm:$0xf]
        %v909 = vld [vmem:[%s475 + $0x8] sm:$0xf]
        %v910 = vld [vmem:[%s475 + $0xc] sm:$0xf]
        %v911 = vld [vmem:[%s475 + $0x10] sm:$0xf]
        %v912 = vld [vmem:[%s475 + $0x14] sm:$0xf]
        %v913 = vld [vmem:[%s475 + $0x18] sm:$0xf]
        %v914 = vld [vmem:[%s475 + $0x1c] sm:$0xf]
        %v923 = vunpack.c.l.b16 %v907
        %v924 = vunpack.c.l.b16 %v908
        %v925 = vunpack.c.l.b16 %v909
        %v926 = vunpack.c.l.b16 %v910
        %v927 = vunpack.c.l.b16 %v911
        %v928 = vunpack.c.l.b16 %v912
        %v929 = vunpack.c.l.b16 %v913
        %v930 = vunpack.c.l.b16 %v914
        %v931 = vpack.c.b16 %v924, %v923
        %v932 = vpack.c.b16 %v926, %v925
        %v933 = vpack.c.b16 %v928, %v927
        %v934 = vpack.c.b16 %v930, %v929
        %939 = vmatprep.subr.bf16.mxu0 0
        %940 = vmatpush1.bf16.msra.mxu0 %v625
        %941 = vmatprep.subr.bf16.mxu0 0
        %942 = vmatpush1.bf16.msra.mxu0 %v626
        %943 = vmatprep.subr.bf16.mxu0 0
        %944 = vmatpush1.bf16.msra.mxu0 %v627
        %945 = vmatprep.subr.bf16.mxu0 0
        %946 = vmatpush1.bf16.msra.mxu0 %v628
        %947 = vmatprep.subr.bf16.mxu0 0
        %948 = vmatpush1.bf16.msra.mxu0 %v629
        %949 = vmatprep.subr.bf16.mxu0 0
        %950 = vmatpush1.bf16.msra.mxu0 %v630
        %951 = vmatprep.subr.bf16.mxu0 0
        %952 = vmatpush1.bf16.msra.mxu0 %v631
        %953 = vmatprep.subr.bf16.mxu0 0
        %954 = vmatpush1.bf16.msra.mxu0 %v632
        %955 = vmatprep.subr.bf16.mxu0 0
        %956 = vmatpush1.bf16.msra.mxu0 0
        %957 = vmatprep.subr.bf16.mxu0 0
        %958 = vmatpush1.bf16.msra.mxu0 0
        %959 = vmatprep.subr.bf16.mxu0 0
        %960 = vmatpush1.bf16.msra.mxu0 0
        %961 = vmatprep.subr.bf16.mxu0 0
        %962 = vmatpush1.bf16.msra.mxu0 0
        %963 = vmatprep.subr.bf16.mxu0 0
        %964 = vmatpush1.bf16.msra.mxu0 0
        %965 = vmatprep.subr.bf16.mxu0 0
        %966 = vmatpush1.bf16.msra.mxu0 0
        %967 = vmatprep.subr.bf16.mxu0 0
        %968 = vmatpush1.bf16.msra.mxu0 0
        %969 = vmatprep.subr.bf16.mxu0 0
        %970 = vmatpush1.bf16.msra.mxu0 0
        %971 = vmatprep.mubr.bf16.mxu0 0
        %972 = vmatmul.mubr.bf16.gmra.mrb[0].mxu0 %v931
        %v973 = vpop.f32.mrb[0].mxu0
        %v974 = vadd.f32 0.0, %v973
        %v975 = vpop.f32.mrb[0].mxu0
        %v976 = vpop.f32.mrb[0].mxu0
        %v977 = vadd.f32 0.0, %v976
        %v978 = vpop.f32.mrb[0].mxu0
        %979 = vmatprep.mubr.bf16.mxu0 0
        %980 = vmatmul.mubr.bf16.gmra.mrb[0].mxu0 %v932
        %v981 = vpop.f32.mrb[0].mxu0
        %v982 = vadd.f32 0.0, %v981
        %v983 = vpop.f32.mrb[0].mxu0
        %v984 = vpop.f32.mrb[0].mxu0
        %v985 = vadd.f32 0.0, %v984
        %v986 = vpop.f32.mrb[0].mxu0
        %987 = vmatprep.mubr.bf16.mxu0 0
        %988 = vmatmul.mubr.bf16.gmra.mrb[0].mxu0 %v933
        %v989 = vpop.f32.mrb[0].mxu0
        %v990 = vadd.f32 0.0, %v989
        %v991 = vpop.f32.mrb[0].mxu0
        %v992 = vpop.f32.mrb[0].mxu0
        %v993 = vadd.f32 0.0, %v992
        %v994 = vpop.f32.mrb[0].mxu0
        %995 = vmatprep.mubr.bf16.mxu0 0
        %996 = vmatmul.mubr.bf16.gmra.mrb[0].mxu0 %v934
        %v997 = vpop.f32.mrb[0].mxu0
        %v998 = vadd.f32 0.0, %v997
        %v999 = vpop.f32.mrb[0].mxu0
        %v1000 = vpop.f32.mrb[0].mxu0
        %v1001 = vadd.f32 0.0, %v1000
        %v1002 = vpop.f32.mrb[0].mxu0
        %1003 = vdwg.mxu0
        %v1004 = vmax.f32 %v811, %v974
        %v1005 = vmax.f32 %v812, %v977
        %v1006 = vmax.f32 %v813, %v982
        %v1007 = vmax.f32 %v814, %v985
        %v1008 = vmax.f32 %v815, %v990
        %v1009 = vmax.f32 %v816, %v993
        %v1010 = vmax.f32 %v817, %v998
        %v1011 = vmax.f32 %v818, %v1001
        %v1012 = vsub.f32 %v811, %v1004
        %v1013 = vsub.f32 %v812, %v1005
        %v1014 = vsub.f32 %v813, %v1006
        %v1015 = vsub.f32 %v814, %v1007
        %v1016 = vsub.f32 %v815, %v1008
        %v1017 = vsub.f32 %v816, %v1009
        %v1018 = vsub.f32 %v817, %v1010
        %v1019 = vsub.f32 %v818, %v1011
        %v1020 = vmul.f32 %v1012, 1.442695
        %v1021 = vpow.pop %v1020
        %v1022 = vmul.f32 %v1013, 1.442695
        %v1023 = vpow.pop %v1022
        %v1024 = vmul.f32 %v1014, 1.442695
        %v1025 = vpow.pop %v1024
        %v1026 = vmul.f32 %v1015, 1.442695
        %v1027 = vpow.pop %v1026
        %v1028 = vmul.f32 %v1016, 1.442695
        %v1029 = vpow.pop %v1028
        %v1030 = vmul.f32 %v1017, 1.442695
        %v1031 = vpow.pop %v1030
        %v1032 = vmul.f32 %v1018, 1.442695
        %v1033 = vpow.pop %v1032
        %v1034 = vmul.f32 %v1019, 1.442695
        %v1035 = vpow.pop %v1034
        %v1036 = vsub.f32 %v974, %v1004
        %v1037 = vsub.f32 %v977, %v1005
        %v1038 = vsub.f32 %v982, %v1006
        %v1039 = vsub.f32 %v985, %v1007
        %v1040 = vsub.f32 %v990, %v1008
        %v1041 = vsub.f32 %v993, %v1009
        %v1042 = vsub.f32 %v998, %v1010
        %v1043 = vsub.f32 %v1001, %v1011
        %v1044 = vmul.f32 %v1036, 1.442695
        %v1045 = vpow.pop %v1044
        %v1046 = vmul.f32 %v1037, 1.442695
        %v1047 = vpow.pop %v1046
        %v1048 = vmul.f32 %v1038, 1.442695
        %v1049 = vpow.pop %v1048
        %v1050 = vmul.f32 %v1039, 1.442695
        %v1051 = vpow.pop %v1050
        %v1052 = vmul.f32 %v1040, 1.442695
        %v1053 = vpow.pop %v1052
        %v1054 = vmul.f32 %v1041, 1.442695
        %v1055 = vpow.pop %v1054
        %v1056 = vmul.f32 %v1042, 1.442695
        %v1057 = vpow.pop %v1056
        %v1058 = vmul.f32 %v1043, 1.442695
        %v1059 = vpow.pop %v1058
        %v1060 = vmul.f32 %v1021, %v867
        %v1061 = vmul.f32 %v1023, %v868
        %v1062 = vmul.f32 %v1025, %v869
        %v1063 = vmul.f32 %v1027, %v870
        %v1064 = vmul.f32 %v1029, %v871
        %v1065 = vmul.f32 %v1031, %v872
        %v1066 = vmul.f32 %v1033, %v873
        %v1067 = vmul.f32 %v1035, %v874
        %v1068 = vadd.f32 %v1060, %v1045
        %v1069 = vadd.f32 %v1061, %v1047
        %v1070 = vadd.f32 %v1062, %v1049
        %v1071 = vadd.f32 %v1063, %v1051
        %v1072 = vadd.f32 %v1064, %v1053
        %v1073 = vadd.f32 %v1065, %v1055
        %v1074 = vadd.f32 %v1066, %v1057
        %v1075 = vadd.f32 %v1067, %v1059
        %v1076 = vmul.f32 %v1021, %v899
        %v1077 = vmul.f32 %v1023, %v900
        %v1078 = vmul.f32 %v1025, %v901
        %v1079 = vmul.f32 %v1027, %v902
        %v1080 = vmul.f32 %v1029, %v903
        %v1081 = vmul.f32 %v1031, %v904
        %v1082 = vmul.f32 %v1033, %v905
        %v1083 = vmul.f32 %v1035, %v906
        %v1084 = vunpack.c.l.bf16 %v907
        %v1085 = vunpack.c.l.bf16 %v908
        %v1086 = vunpack.c.l.bf16 %v909
        %v1087 = vunpack.c.l.bf16 %v910
        %v1088 = vunpack.c.l.bf16 %v911
        %v1089 = vunpack.c.l.bf16 %v912
        %v1090 = vunpack.c.l.bf16 %v913
        %v1091 = vunpack.c.l.bf16 %v914
        %v1092 = vmul.f32 %v1045, %v1084
        %v1093 = vmul.f32 %v1047, %v1085
        %v1094 = vmul.f32 %v1049, %v1086
        %v1095 = vmul.f32 %v1051, %v1087
        %v1096 = vmul.f32 %v1053, %v1088
        %v1097 = vmul.f32 %v1055, %v1089
        %v1098 = vmul.f32 %v1057, %v1090
        %v1099 = vmul.f32 %v1059, %v1091
        %v1100 = vadd.f32 %v1076, %v1092
        %v1101 = vadd.f32 %v1077, %v1093
        %v1102 = vadd.f32 %v1078, %v1094
        %v1103 = vadd.f32 %v1079, %v1095
        %v1104 = vadd.f32 %v1080, %v1096
        %v1105 = vadd.f32 %v1081, %v1097
        %v1106 = vadd.f32 %v1082, %v1098
        %v1107 = vadd.f32 %v1083, %v1099
        %v1108 = vrcp.pop %v1068
        %v1109 = vrcp.pop %v1069
        %v1110 = vrcp.pop %v1070
        %v1111 = vrcp.pop %v1071
        %v1112 = vrcp.pop %v1072
        %v1113 = vrcp.pop %v1073
        %v1114 = vrcp.pop %v1074
        %v1115 = vrcp.pop %v1075
        %v1116 = vmul.f32 %v1100, %v1108
        %v1117 = vmul.f32 %v1101, %v1109
        %v1118 = vmul.f32 %v1102, %v1110
        %v1119 = vmul.f32 %v1103, %v1111
        %v1120 = vmul.f32 %v1104, %v1112
        %v1121 = vmul.f32 %v1105, %v1113
        %v1122 = vmul.f32 %v1106, %v1114
        %v1123 = vmul.f32 %v1107, %v1115
        %v1124 = vld [vmem:[#allocation10] sm:$0xff]
        %v1125 = vld [vmem:[#allocation10 + $0x8] sm:$0xff]
        %v1126 = vld [vmem:[#allocation10 + $0x10] sm:$0xff]
        %v1127 = vld [vmem:[#allocation10 + $0x18] sm:$0xff]
        %v1128 = vld [vmem:[#allocation10 + $0x20] sm:$0xff]
        %v1129 = vld [vmem:[#allocation10 + $0x28] sm:$0xff]
        %v1130 = vld [vmem:[#allocation10 + $0x30] sm:$0xff]
        %v1131 = vld [vmem:[#allocation10 + $0x38] sm:$0xff]
        %v1132 = vld [vmem:[#allocation10 + $0x40] sm:$0xff]
        %v1133 = vld [vmem:[#allocation10 + $0x48] sm:$0xff]
        %v1134 = vld [vmem:[#allocation10 + $0x50] sm:$0xff]
        %v1135 = vld [vmem:[#allocation10 + $0x58] sm:$0xff]
        %v1136 = vld [vmem:[#allocation10 + $0x60] sm:$0xff]
        %v1137 = vld [vmem:[#allocation10 + $0x68] sm:$0xff]
        %v1138 = vld [vmem:[#allocation10 + $0x70] sm:$0xff]
        %v1139 = vld [vmem:[#allocation10 + $0x78] sm:$0xff]
        %1140 = vmatprep.subr.mxu0 0.0
        %1141 = vmatpush1.msra.mxu0 %v1124
        %1142 = vmatprep.subr.mxu0 0.0
        %1143 = vmatpush1.msra.mxu0 %v1125
        %1144 = vmatprep.subr.mxu0 0.0
        %1145 = vmatpush1.msra.mxu0 %v1126
        %1146 = vmatprep.subr.mxu0 0.0
        %1147 = vmatpush1.msra.mxu0 %v1127
        %1148 = vmatprep.subr.mxu0 0.0
        %1149 = vmatpush1.msra.mxu0 %v1128
        %1150 = vmatprep.subr.mxu0 0.0
        %1151 = vmatpush1.msra.mxu0 %v1129
        %1152 = vmatprep.subr.mxu0 0.0
        %1153 = vmatpush1.msra.mxu0 %v1130
        %1154 = vmatprep.subr.mxu0 0.0
        %1155 = vmatpush1.msra.mxu0 %v1131
        %1156 = vmatprep.subr.mxu0 0.0
        %1157 = vmatpush1.msra.mxu0 %v1132
        %1158 = vmatprep.subr.mxu0 0.0
        %1159 = vmatpush1.msra.mxu0 %v1133
        %1160 = vmatprep.subr.mxu0 0.0
        %1161 = vmatpush1.msra.mxu0 %v1134
        %1162 = vmatprep.subr.mxu0 0.0
        %1163 = vmatpush1.msra.mxu0 %v1135
        %1164 = vmatprep.subr.mxu0 0.0
        %1165 = vmatpush1.msra.mxu0 %v1136
        %1166 = vmatprep.subr.mxu0 0.0
        %1167 = vmatpush1.msra.mxu0 %v1137
        %1168 = vmatprep.subr.mxu0 0.0
        %1169 = vmatpush1.msra.mxu0 %v1138
        %1170 = vmatprep.subr.mxu0 0.0
        %1171 = vmatpush1.msra.mxu0 %v1139
        %1172 = vmatprep.subr.mxu0 0.0
        %1173 = vmatpush1.msra.mxu0 0.0
        %1174 = vmatprep.subr.mxu0 0.0
        %1175 = vmatpush1.msra.mxu0 0.0
        %1176 = vmatprep.subr.mxu0 0.0
        %1177 = vmatpush1.msra.mxu0 0.0
        %1178 = vmatprep.subr.mxu0 0.0
        %1179 = vmatpush1.msra.mxu0 0.0
        %1180 = vmatprep.subr.mxu0 0.0
        %1181 = vmatpush1.msra.mxu0 0.0
        %1182 = vmatprep.subr.mxu0 0.0
        %1183 = vmatpush1.msra.mxu0 0.0
        %1184 = vmatprep.subr.mxu0 0.0
        %1185 = vmatpush1.msra.mxu0 0.0
        %1186 = vmatprep.subr.mxu0 0.0
        %1187 = vmatpush1.msra.mxu0 0.0
        %1188 = vmatprep.subr.mxu0 0.0
        %1189 = vmatpush1.msra.mxu0 0.0
        %1190 = vmatprep.subr.mxu0 0.0
        %1191 = vmatpush1.msra.mxu0 0.0
        %1192 = vmatprep.subr.mxu0 0.0
        %1193 = vmatpush1.msra.mxu0 0.0
        %1194 = vmatprep.subr.mxu0 0.0
        %1195 = vmatpush1.msra.mxu0 0.0
        %1196 = vmatprep.subr.mxu0 0.0
        %1197 = vmatpush1.msra.mxu0 0.0
        %1198 = vmatprep.subr.mxu0 0.0
        %1199 = vmatpush1.msra.mxu0 0.0
        %1200 = vmatprep.subr.mxu0 0.0
        %1201 = vmatpush1.msra.mxu0 0.0
        %1202 = vmatprep.subr.mxu0 0.0
        %1203 = vmatpush1.msra.mxu0 0.0
        %1204 = vmatprep.mubr.f32.mxu0 0.0
        %1205 = vmatmul.mubr.f32.gmra.mrb[0].mxu0 %v1116
        %v1206 = vpop.f32.mrb[0].mxu0
        %v1207 = vadd.f32 0.0, %v1206
        %v1208 = vpop.f32.mrb[0].mxu0
        %1209 = vmatprep.mubr.f32.mxu0 0.0
        %1210 = vmatmul.mubr.f32.gmra.mrb[0].mxu0 %v1117
        %v1211 = vpop.f32.mrb[0].mxu0
        %v1212 = vadd.f32 0.0, %v1211
        %v1213 = vpop.f32.mrb[0].mxu0
        %1214 = vmatprep.mubr.f32.mxu0 0.0
        %1215 = vmatmul.mubr.f32.gmra.mrb[0].mxu0 %v1118
        %v1216 = vpop.f32.mrb[0].mxu0
        %v1217 = vadd.f32 0.0, %v1216
        %v1218 = vpop.f32.mrb[0].mxu0
        %1219 = vmatprep.mubr.f32.mxu0 0.0
        %1220 = vmatmul.mubr.f32.gmra.mrb[0].mxu0 %v1119
        %v1221 = vpop.f32.mrb[0].mxu0
        %v1222 = vadd.f32 0.0, %v1221
        %v1223 = vpop.f32.mrb[0].mxu0
        %1224 = vmatprep.mubr.f32.mxu0 0.0
        %1225 = vmatmul.mubr.f32.gmra.mrb[0].mxu0 %v1120
        %v1226 = vpop.f32.mrb[0].mxu0
        %v1227 = vadd.f32 0.0, %v1226
        %v1228 = vpop.f32.mrb[0].mxu0
        %1229 = vmatprep.mubr.f32.mxu0 0.0
        %1230 = vmatmul.mubr.f32.gmra.mrb[0].mxu0 %v1121
        %v1231 = vpop.f32.mrb[0].mxu0
        %v1232 = vadd.f32 0.0, %v1231
        %v1233 = vpop.f32.mrb[0].mxu0
        %1234 = vmatprep.mubr.f32.mxu0 0.0
        %1235 = vmatmul.mubr.f32.gmra.mrb[0].mxu0 %v1122
        %v1236 = vpop.f32.mrb[0].mxu0
        %v1237 = vadd.f32 0.0, %v1236
        %v1238 = vpop.f32.mrb[0].mxu0
        %1239 = vmatprep.mubr.f32.mxu0 0.0
        %1240 = vmatmul.mubr.f32.gmra.mrb[0].mxu0 %v1123
        %v1241 = vpop.f32.mrb[0].mxu0
        %v1242 = vadd.f32 0.0, %v1241
        %v1243 = vpop.f32.mrb[0].mxu0
        %1244 = vdwg.mxu0
        %v1245 = vsub.f32 %v1116, %v1207
        %v1246 = vsub.f32 %v1117, %v1212
        %v1247 = vsub.f32 %v1118, %v1217
        %v1248 = vsub.f32 %v1119, %v1222
        %v1249 = vsub.f32 %v1120, %v1227
        %v1250 = vsub.f32 %v1121, %v1232
        %v1251 = vsub.f32 %v1122, %v1237
        %v1252 = vsub.f32 %v1123, %v1242
        %v1253 = vmul.f32 %v1245, %v1245
        %v1254 = vmul.f32 %v1246, %v1246
        %v1255 = vmul.f32 %v1247, %v1247
        %v1256 = vmul.f32 %v1248, %v1248
        %v1257 = vmul.f32 %v1249, %v1249
        %v1258 = vmul.f32 %v1250, %v1250
        %v1259 = vmul.f32 %v1251, %v1251
        %v1260 = vmul.f32 %v1252, %v1252
        %1261 = vmatprep.subr.mxu0 0.0
        %1262 = vmatpush1.msra.mxu0 %v1124
        %1263 = vmatprep.subr.mxu0 0.0
        %1264 = vmatpush1.msra.mxu0 %v1125
        %1265 = vmatprep.subr.mxu0 0.0
        %1266 = vmatpush1.msra.mxu0 %v1126
        %1267 = vmatprep.subr.mxu0 0.0
        %1268 = vmatpush1.msra.mxu0 %v1127
        %1269 = vmatprep.subr.mxu0 0.0
        %1270 = vmatpush1.msra.mxu0 %v1128
        %1271 = vmatprep.subr.mxu0 0.0
        %1272 = vmatpush1.msra.mxu0 %v1129
        %1273 = vmatprep.subr.mxu0 0.0
        %1274 = vmatpush1.msra.mxu0 %v1130
        %1275 = vmatprep.subr.mxu0 0.0
        %1276 = vmatpush1.msra.mxu0 %v1131
        %1277 = vmatprep.subr.mxu0 0.0
        %1278 = vmatpush1.msra.mxu0 %v1132
        %1279 = vmatprep.subr.mxu0 0.0
        %1280 = vmatpush1.msra.mxu0 %v1133
        %1281 = vmatprep.subr.mxu0 0.0
        %1282 = vmatpush1.msra.mxu0 %v1134
        %1283 = vmatprep.subr.mxu0 0.0
        %1284 = vmatpush1.msra.mxu0 %v1135
        %1285 = vmatprep.subr.mxu0 0.0
        %1286 = vmatpush1.msra.mxu0 %v1136
        %1287 = vmatprep.subr.mxu0 0.0
        %1288 = vmatpush1.msra.mxu0 %v1137
        %1289 = vmatprep.subr.mxu0 0.0
        %1290 = vmatpush1.msra.mxu0 %v1138
        %1291 = vmatprep.subr.mxu0 0.0
        %1292 = vmatpush1.msra.mxu0 %v1139
        %1293 = vmatprep.subr.mxu0 0.0
        %1294 = vmatpush1.msra.mxu0 0.0
        %1295 = vmatprep.subr.mxu0 0.0
        %1296 = vmatpush1.msra.mxu0 0.0
        %1297 = vmatprep.subr.mxu0 0.0
        %1298 = vmatpush1.msra.mxu0 0.0
        %1299 = vmatprep.subr.mxu0 0.0
        %1300 = vmatpush1.msra.mxu0 0.0
        %1301 = vmatprep.subr.mxu0 0.0
        %1302 = vmatpush1.msra.mxu0 0.0
        %1303 = vmatprep.subr.mxu0 0.0
        %1304 = vmatpush1.msra.mxu0 0.0
        %1305 = vmatprep.subr.mxu0 0.0
        %1306 = vmatpush1.msra.mxu0 0.0
        %1307 = vmatprep.subr.mxu0 0.0
        %1308 = vmatpush1.msra.mxu0 0.0
        %1309 = vmatprep.subr.mxu0 0.0
        %1310 = vmatpush1.msra.mxu0 0.0
        %1311 = vmatprep.subr.mxu0 0.0
        %1312 = vmatpush1.msra.mxu0 0.0
        %1313 = vmatprep.subr.mxu0 0.0
        %1314 = vmatpush1.msra.mxu0 0.0
        %1315 = vmatprep.subr.mxu0 0.0
        %1316 = vmatpush1.msra.mxu0 0.0
        %1317 = vmatprep.subr.mxu0 0.0
        %1318 = vmatpush1.msra.mxu0 0.0
        %1319 = vmatprep.subr.mxu0 0.0
        %1320 = vmatpush1.msra.mxu0 0.0
        %1321 = vmatprep.subr.mxu0 0.0
        %1322 = vmatpush1.msra.mxu0 0.0
        %1323 = vmatprep.subr.mxu0 0.0
        %1324 = vmatpush1.msra.mxu0 0.0
        %1325 = vmatprep.mubr.f32.mxu0 0.0
        %1326 = vmatmul.mubr.f32.gmra.mrb[0].mxu0 %v1253
        %v1327 = vpop.f32.mrb[0].mxu0
        %v1328 = vadd.f32 1e-05, %v1327
        %v1329 = vpop.f32.mrb[0].mxu0
        %1330 = vmatprep.mubr.f32.mxu0 0.0
        %1331 = vmatmul.mubr.f32.gmra.mrb[0].mxu0 %v1254
        %v1332 = vpop.f32.mrb[0].mxu0
        %v1333 = vadd.f32 1e-05, %v1332
        %v1334 = vpop.f32.mrb[0].mxu0
        %1335 = vmatprep.mubr.f32.mxu0 0.0
        %1336 = vmatmul.mubr.f32.gmra.mrb[0].mxu0 %v1255
        %v1337 = vpop.f32.mrb[0].mxu0
        %v1338 = vadd.f32 1e-05, %v1337
        %v1339 = vpop.f32.mrb[0].mxu0
        %1340 = vmatprep.mubr.f32.mxu0 0.0
        %1341 = vmatmul.mubr.f32.gmra.mrb[0].mxu0 %v1256
        %v1342 = vpop.f32.mrb[0].mxu0
        %v1343 = vadd.f32 1e-05, %v1342
        %v1344 = vpop.f32.mrb[0].mxu0
        %1345 = vmatprep.mubr.f32.mxu0 0.0
        %1346 = vmatmul.mubr.f32.gmra.mrb[0].mxu0 %v1257
        %v1347 = vpop.f32.mrb[0].mxu0
        %v1348 = vadd.f32 1e-05, %v1347
        %v1349 = vpop.f32.mrb[0].mxu0
        %1350 = vmatprep.mubr.f32.mxu0 0.0
        %1351 = vmatmul.mubr.f32.gmra.mrb[0].mxu0 %v1258
        %v1352 = vpop.f32.mrb[0].mxu0
        %v1353 = vadd.f32 1e-05, %v1352
        %v1354 = vpop.f32.mrb[0].mxu0
        %1355 = vmatprep.mubr.f32.mxu0 0.0
        %1356 = vmatmul.mubr.f32.gmra.mrb[0].mxu0 %v1259
        %v1357 = vpop.f32.mrb[0].mxu0
        %v1358 = vadd.f32 1e-05, %v1357
        %v1359 = vpop.f32.mrb[0].mxu0
        %1360 = vmatprep.mubr.f32.mxu0 0.0
        %1361 = vmatmul.mubr.f32.gmra.mrb[0].mxu0 %v1260
        %v1362 = vpop.f32.mrb[0].mxu0
        %v1363 = vadd.f32 1e-05, %v1362
        %v1364 = vpop.f32.mrb[0].mxu0
        %1365 = vdwg.mxu0
        %v1366 = vrsqrt.pop %v1328
        %v1367 = vrsqrt.pop %v1333
        %v1368 = vrsqrt.pop %v1338
        %v1369 = vrsqrt.pop %v1343
        %v1370 = vrsqrt.pop %v1348
        %v1371 = vrsqrt.pop %v1353
        %v1372 = vrsqrt.pop %v1358
        %v1373 = vrsqrt.pop %v1363
        %v1374 = vmul.f32 %v1245, %v1366
        %v1375 = vmul.f32 %v1246, %v1367
        %v1376 = vmul.f32 %v1247, %v1368
        %v1377 = vmul.f32 %v1248, %v1369
        %v1378 = vmul.f32 %v1249, %v1370
        %v1379 = vmul.f32 %v1250, %v1371
        %v1380 = vmul.f32 %v1251, %v1372
        %v1381 = vmul.f32 %v1252, %v1373
        %v1382 = vld [vmem:[%s5] sm:$0x1]
        %v1384 = vlaneseq
        %v1385 = vshrl.u32 %v1384, 7
        %v1386 = vsub.s32 0, %v1385
        %v1387 = vrot.slane %v1382, %v1386
        %v1389 = vmul.f32 %v1374, %v1387
        %v1390 = vmul.f32 %v1375, %v1387
        %v1391 = vmul.f32 %v1376, %v1387
        %v1392 = vmul.f32 %v1377, %v1387
        %v1393 = vmul.f32 %v1378, %v1387
        %v1394 = vmul.f32 %v1379, %v1387
        %v1395 = vmul.f32 %v1380, %v1387
        %v1396 = vmul.f32 %v1381, %v1387
        %v1397 = vld [vmem:[%s6] sm:$0x1]
        %v1399 = vlaneseq
        %v1400 = vshrl.u32 %v1399, 7
        %v1401 = vsub.s32 0, %v1400
        %v1402 = vrot.slane %v1397, %v1401
        %v1404 = vadd.f32 %v1389, %v1402
        %v1405 = vadd.f32 %v1390, %v1402
        %v1406 = vadd.f32 %v1391, %v1402
        %v1407 = vadd.f32 %v1392, %v1402
        %v1408 = vadd.f32 %v1393, %v1402
        %v1409 = vadd.f32 %v1394, %v1402
        %v1410 = vadd.f32 %v1395, %v1402
        %v1411 = vadd.f32 %v1396, %v1402
        %v1412 = vpack.c.bf16 %v1405, %v1404
        %v1413 = vpack.c.bf16 %v1407, %v1406
        %v1414 = vpack.c.bf16 %v1409, %v1408
        %v1415 = vpack.c.bf16 %v1411, %v1410
        %v1416 = vld [vmem:[#allocation11] sm:$0xff]
        %v1417 = vld [vmem:[#allocation11 + $0x8] sm:$0xff]
        %v1418 = vld [vmem:[#allocation11 + $0x10] sm:$0xff]
        %v1419 = vld [vmem:[#allocation11 + $0x18] sm:$0xff]
        %v1420 = vld [vmem:[#allocation11 + $0x20] sm:$0xff]
        %v1421 = vld [vmem:[#allocation11 + $0x28] sm:$0xff]
        %v1422 = vld [vmem:[#allocation11 + $0x30] sm:$0xff]
        %v1423 = vld [vmem:[#allocation11 + $0x38] sm:$0xff]
        %v1424 = vld [vmem:[#allocation11 + $0x40] sm:$0xff]
        %v1425 = vld [vmem:[#allocation11 + $0x48] sm:$0xff]
        %v1426 = vld [vmem:[#allocation11 + $0x50] sm:$0xff]
        %v1427 = vld [vmem:[#allocation11 + $0x58] sm:$0xff]
        %v1428 = vld [vmem:[#allocation11 + $0x60] sm:$0xff]
        %v1429 = vld [vmem:[#allocation11 + $0x68] sm:$0xff]
        %v1430 = vld [vmem:[#allocation11 + $0x70] sm:$0xff]
        %v1431 = vld [vmem:[#allocation11 + $0x78] sm:$0xff]
        %v1432 = vld [vmem:[%s8] sm:$0x3]
        %v1434 = vlaneseq
        %v1435 = vshrl.u32 %v1434, 7
        %v1436 = vsub.s32 0, %v1435
        %v1437 = vrot.slane %v1432, %v1436
        %v1438 = vlaneseq
        %v1439 = vshrl.u32 %v1438, 7
        %v1440 = vsub.s32 1, %v1439
        %v1441 = vrot.slane %v1432, %v1440
        %v1460 = vunpack.c.l.b16 %v1416
        %v1461 = vunpack.c.h.b16 %v1416
        %v1462 = vunpack.c.l.b16 %v1417
        %v1463 = vunpack.c.h.b16 %v1417
        %v1464 = vunpack.c.l.b16 %v1418
        %v1465 = vunpack.c.h.b16 %v1418
        %v1466 = vunpack.c.l.b16 %v1419
        %v1467 = vunpack.c.h.b16 %v1419
        %v1468 = vunpack.c.l.b16 %v1420
        %v1469 = vunpack.c.h.b16 %v1420
        %v1470 = vunpack.c.l.b16 %v1421
        %v1471 = vunpack.c.h.b16 %v1421
        %v1472 = vunpack.c.l.b16 %v1422
        %v1473 = vunpack.c.h.b16 %v1422
        %v1474 = vunpack.c.l.b16 %v1423
        %v1475 = vunpack.c.h.b16 %v1423
        %v1476 = vunpack.c.l.b16 %v1424
        %v1477 = vunpack.c.h.b16 %v1424
        %v1478 = vunpack.c.l.b16 %v1425
        %v1479 = vunpack.c.h.b16 %v1425
        %v1480 = vunpack.c.l.b16 %v1426
        %v1481 = vunpack.c.h.b16 %v1426
        %v1482 = vunpack.c.l.b16 %v1427
        %v1483 = vunpack.c.h.b16 %v1427
        %v1484 = vunpack.c.l.b16 %v1428
        %v1485 = vunpack.c.h.b16 %v1428
        %v1486 = vunpack.c.l.b16 %v1429
        %v1487 = vunpack.c.h.b16 %v1429
        %v1488 = vunpack.c.l.b16 %v1430
        %v1489 = vunpack.c.h.b16 %v1430
        %v1490 = vunpack.c.l.b16 %v1431
        %v1491 = vunpack.c.h.b16 %v1431
        %v1492 = vpack.c.b16 %v1462, %v1460
        %v1493 = vpack.c.b16 %v1463, %v1461
        %v1494 = vpack.c.b16 %v1466, %v1464
        %v1495 = vpack.c.b16 %v1467, %v1465
        %v1496 = vpack.c.b16 %v1470, %v1468
        %v1497 = vpack.c.b16 %v1471, %v1469
        %v1498 = vpack.c.b16 %v1474, %v1472
        %v1499 = vpack.c.b16 %v1475, %v1473
        %v1500 = vpack.c.b16 %v1478, %v1476
        %v1501 = vpack.c.b16 %v1479, %v1477
        %v1502 = vpack.c.b16 %v1482, %v1480
        %v1503 = vpack.c.b16 %v1483, %v1481
        %v1504 = vpack.c.b16 %v1486, %v1484
        %v1505 = vpack.c.b16 %v1487, %v1485
        %v1506 = vpack.c.b16 %v1490, %v1488
        %v1507 = vpack.c.b16 %v1491, %v1489
        %1524 = vmatprep.subr.bf16.mxu0 %v1493
        %1525 = vmatpush1.bf16.msra.mxu0 %v1492
        %1526 = vmatprep.subr.bf16.mxu0 %v1495
        %1527 = vmatpush1.bf16.msra.mxu0 %v1494
        %1528 = vmatprep.subr.bf16.mxu0 %v1497
        %1529 = vmatpush1.bf16.msra.mxu0 %v1496
        %1530 = vmatprep.subr.bf16.mxu0 %v1499
        %1531 = vmatpush1.bf16.msra.mxu0 %v1498
        %1532 = vmatprep.subr.bf16.mxu0 %v1501
        %1533 = vmatpush1.bf16.msra.mxu0 %v1500
        %1534 = vmatprep.subr.bf16.mxu0 %v1503
        %1535 = vmatpush1.bf16.msra.mxu0 %v1502
        %1536 = vmatprep.subr.bf16.mxu0 %v1505
        %1537 = vmatpush1.bf16.msra.mxu0 %v1504
        %1538 = vmatprep.subr.bf16.mxu0 %v1507
        %1539 = vmatpush1.bf16.msra.mxu0 %v1506
        %1540 = vmatprep.subr.bf16.mxu0 0
        %1541 = vmatpush1.bf16.msra.mxu0 0
        %1542 = vmatprep.subr.bf16.mxu0 0
        %1543 = vmatpush1.bf16.msra.mxu0 0
        %1544 = vmatprep.subr.bf16.mxu0 0
        %1545 = vmatpush1.bf16.msra.mxu0 0
        %1546 = vmatprep.subr.bf16.mxu0 0
        %1547 = vmatpush1.bf16.msra.mxu0 0
        %1548 = vmatprep.subr.bf16.mxu0 0
        %1549 = vmatpush1.bf16.msra.mxu0 0
        %1550 = vmatprep.subr.bf16.mxu0 0
        %1551 = vmatpush1.bf16.msra.mxu0 0
        %1552 = vmatprep.subr.bf16.mxu0 0
        %1553 = vmatpush1.bf16.msra.mxu0 0
        %1554 = vmatprep.subr.bf16.mxu0 0
        %1555 = vmatpush1.bf16.msra.mxu0 0
        %1556 = vmatprep.mubr.bf16.mxu0 0
        %1557 = vmatmul.mubr.bf16.gmra.mrb[0].mxu0 %v1412
        %v1558 = vpop.f32.mrb[0].mxu0
        %v1559 = vadd.f32 %v1437, %v1558
        %v1560 = vpop.f32.mrb[0].mxu0
        %v1561 = vadd.f32 %v1441, %v1560
        %v1562 = vpop.f32.mrb[0].mxu0
        %v1563 = vadd.f32 %v1437, %v1562
        %v1564 = vpop.f32.mrb[0].mxu0
        %v1565 = vadd.f32 %v1441, %v1564
        %1566 = vmatprep.mubr.bf16.mxu0 0
        %1567 = vmatmul.mubr.bf16.gmra.mrb[0].mxu0 %v1413
        %v1568 = vpop.f32.mrb[0].mxu0
        %v1569 = vadd.f32 %v1437, %v1568
        %v1570 = vpop.f32.mrb[0].mxu0
        %v1571 = vadd.f32 %v1441, %v1570
        %v1572 = vpop.f32.mrb[0].mxu0
        %v1573 = vadd.f32 %v1437, %v1572
        %v1574 = vpop.f32.mrb[0].mxu0
        %v1575 = vadd.f32 %v1441, %v1574
        %1576 = vmatprep.mubr.bf16.mxu0 0
        %1577 = vmatmul.mubr.bf16.gmra.mrb[0].mxu0 %v1414
        %v1578 = vpop.f32.mrb[0].mxu0
        %v1579 = vadd.f32 %v1437, %v1578
        %v1580 = vpop.f32.mrb[0].mxu0
        %v1581 = vadd.f32 %v1441, %v1580
        %v1582 = vpop.f32.mrb[0].mxu0
        %v1583 = vadd.f32 %v1437, %v1582
        %v1584 = vpop.f32.mrb[0].mxu0
        %v1585 = vadd.f32 %v1441, %v1584
        %1586 = vmatprep.mubr.bf16.mxu0 0
        %1587 = vmatmul.mubr.bf16.gmra.mrb[0].mxu0 %v1415
        %v1588 = vpop.f32.mrb[0].mxu0
        %v1589 = vadd.f32 %v1437, %v1588
        %v1590 = vpop.f32.mrb[0].mxu0
        %v1591 = vadd.f32 %v1441, %v1590
        %v1592 = vpop.f32.mrb[0].mxu0
        %v1593 = vadd.f32 %v1437, %v1592
        %v1594 = vpop.f32.mrb[0].mxu0
        %v1595 = vadd.f32 %v1441, %v1594
        %1596 = vdwg.mxu0
        %v1597 = vmul.f32 %v1559, %v1559
        %v1598 = vmul.f32 %v1561, %v1561
        %v1599 = vmul.f32 %v1563, %v1563
        %v1600 = vmul.f32 %v1565, %v1565
        %v1601 = vmul.f32 %v1569, %v1569
        %v1602 = vmul.f32 %v1571, %v1571
        %v1603 = vmul.f32 %v1573, %v1573
        %v1604 = vmul.f32 %v1575, %v1575
        %v1605 = vmul.f32 %v1579, %v1579
        %v1606 = vmul.f32 %v1581, %v1581
        %v1607 = vmul.f32 %v1583, %v1583
        %v1608 = vmul.f32 %v1585, %v1585
        %v1609 = vmul.f32 %v1589, %v1589
        %v1610 = vmul.f32 %v1591, %v1591
        %v1611 = vmul.f32 %v1593, %v1593
        %v1612 = vmul.f32 %v1595, %v1595
        %v1613 = vmul.f32 %v1559, %v1597
        %v1614 = vmul.f32 %v1561, %v1598
        %v1615 = vmul.f32 %v1563, %v1599
        %v1616 = vmul.f32 %v1565, %v1600
        %v1617 = vmul.f32 %v1569, %v1601
        %v1618 = vmul.f32 %v1571, %v1602
        %v1619 = vmul.f32 %v1573, %v1603
        %v1620 = vmul.f32 %v1575, %v1604
        %v1621 = vmul.f32 %v1579, %v1605
        %v1622 = vmul.f32 %v1581, %v1606
        %v1623 = vmul.f32 %v1583, %v1607
        %v1624 = vmul.f32 %v1585, %v1608
        %v1625 = vmul.f32 %v1589, %v1609
        %v1626 = vmul.f32 %v1591, %v1610
        %v1627 = vmul.f32 %v1593, %v1611
        %v1628 = vmul.f32 %v1595, %v1612
        %v1629 = vmul.f32 %v1613, 0.044715
        %v1630 = vmul.f32 %v1614, 0.044715
        %v1631 = vmul.f32 %v1615, 0.044715
        %v1632 = vmul.f32 %v1616, 0.044715
        %v1633 = vmul.f32 %v1617, 0.044715
        %v1634 = vmul.f32 %v1618, 0.044715
        %v1635 = vmul.f32 %v1619, 0.044715
        %v1636 = vmul.f32 %v1620, 0.044715
        %v1637 = vmul.f32 %v1621, 0.044715
        %v1638 = vmul.f32 %v1622, 0.044715
        %v1639 = vmul.f32 %v1623, 0.044715
        %v1640 = vmul.f32 %v1624, 0.044715
        %v1641 = vmul.f32 %v1625, 0.044715
        %v1642 = vmul.f32 %v1626, 0.044715
        %v1643 = vmul.f32 %v1627, 0.044715
        %v1644 = vmul.f32 %v1628, 0.044715
        %v1645 = vadd.f32 %v1559, %v1629
        %v1646 = vadd.f32 %v1561, %v1630
        %v1647 = vadd.f32 %v1563, %v1631
        %v1648 = vadd.f32 %v1565, %v1632
        %v1649 = vadd.f32 %v1569, %v1633
        %v1650 = vadd.f32 %v1571, %v1634
        %v1651 = vadd.f32 %v1573, %v1635
        %v1652 = vadd.f32 %v1575, %v1636
        %v1653 = vadd.f32 %v1579, %v1637
        %v1654 = vadd.f32 %v1581, %v1638
        %v1655 = vadd.f32 %v1583, %v1639
        %v1656 = vadd.f32 %v1585, %v1640
        %v1657 = vadd.f32 %v1589, %v1641
        %v1658 = vadd.f32 %v1591, %v1642
        %v1659 = vadd.f32 %v1593, %v1643
        %v1660 = vadd.f32 %v1595, %v1644
        %v1661 = vmul.f32 %v1645, 0.7978846
        %v1662 = vmul.f32 %v1646, 0.7978846
        %v1663 = vmul.f32 %v1647, 0.7978846
        %v1664 = vmul.f32 %v1648, 0.7978846
        %v1665 = vmul.f32 %v1649, 0.7978846
        %v1666 = vmul.f32 %v1650, 0.7978846
        %v1667 = vmul.f32 %v1651, 0.7978846
        %v1668 = vmul.f32 %v1652, 0.7978846
        %v1669 = vmul.f32 %v1653, 0.7978846
        %v1670 = vmul.f32 %v1654, 0.7978846
        %v1671 = vmul.f32 %v1655, 0.7978846
        %v1672 = vmul.f32 %v1656, 0.7978846
        %v1673 = vmul.f32 %v1657, 0.7978846
        %v1674 = vmul.f32 %v1658, 0.7978846
        %v1675 = vmul.f32 %v1659, 0.7978846
        %v1676 = vmul.f32 %v1660, 0.7978846
        %v1677 = vtanh.pop %v1661
        %v1678 = vtanh.pop %v1662
        %v1679 = vtanh.pop %v1663
        %v1680 = vtanh.pop %v1664
        %v1681 = vtanh.pop %v1665
        %v1682 = vtanh.pop %v1666
        %v1683 = vtanh.pop %v1667
        %v1684 = vtanh.pop %v1668
        %v1685 = vtanh.pop %v1669
        %v1686 = vtanh.pop %v1670
        %v1687 = vtanh.pop %v1671
        %v1688 = vtanh.pop %v1672
        %v1689 = vtanh.pop %v1673
        %v1690 = vtanh.pop %v1674
        %v1691 = vtanh.pop %v1675
        %v1692 = vtanh.pop %v1676
        %v1693 = vadd.f32 %v1677, 1.0
        %v1694 = vadd.f32 %v1678, 1.0
        %v1695 = vadd.f32 %v1679, 1.0
        %v1696 = vadd.f32 %v1680, 1.0
        %v1697 = vadd.f32 %v1681, 1.0
        %v1698 = vadd.f32 %v1682, 1.0
        %v1699 = vadd.f32 %v1683, 1.0
        %v1700 = vadd.f32 %v1684, 1.0
        %v1701 = vadd.f32 %v1685, 1.0
        %v1702 = vadd.f32 %v1686, 1.0
        %v1703 = vadd.f32 %v1687, 1.0
        %v1704 = vadd.f32 %v1688, 1.0
        %v1705 = vadd.f32 %v1689, 1.0
        %v1706 = vadd.f32 %v1690, 1.0
        %v1707 = vadd.f32 %v1691, 1.0
        %v1708 = vadd.f32 %v1692, 1.0
        %v1709 = vmul.f32 %v1693, 0.5
        %v1710 = vmul.f32 %v1694, 0.5
        %v1711 = vmul.f32 %v1695, 0.5
        %v1712 = vmul.f32 %v1696, 0.5
        %v1713 = vmul.f32 %v1697, 0.5
        %v1714 = vmul.f32 %v1698, 0.5
        %v1715 = vmul.f32 %v1699, 0.5
        %v1716 = vmul.f32 %v1700, 0.5
        %v1717 = vmul.f32 %v1701, 0.5
        %v1718 = vmul.f32 %v1702, 0.5
        %v1719 = vmul.f32 %v1703, 0.5
        %v1720 = vmul.f32 %v1704, 0.5
        %v1721 = vmul.f32 %v1705, 0.5
        %v1722 = vmul.f32 %v1706, 0.5
        %v1723 = vmul.f32 %v1707, 0.5
        %v1724 = vmul.f32 %v1708, 0.5
        %v1725 = vmul.f32 %v1559, %v1709
        %v1726 = vmul.f32 %v1561, %v1710
        %v1727 = vmul.f32 %v1563, %v1711
        %v1728 = vmul.f32 %v1565, %v1712
        %v1729 = vmul.f32 %v1569, %v1713
        %v1730 = vmul.f32 %v1571, %v1714
        %v1731 = vmul.f32 %v1573, %v1715
        %v1732 = vmul.f32 %v1575, %v1716
        %v1733 = vmul.f32 %v1579, %v1717
        %v1734 = vmul.f32 %v1581, %v1718
        %v1735 = vmul.f32 %v1583, %v1719
        %v1736 = vmul.f32 %v1585, %v1720
        %v1737 = vmul.f32 %v1589, %v1721
        %v1738 = vmul.f32 %v1591, %v1722
        %v1739 = vmul.f32 %v1593, %v1723
        %v1740 = vmul.f32 %v1595, %v1724
        %v1741 = vpack.c.bf16 %v1727, %v1725
        %v1742 = vpack.c.bf16 %v1728, %v1726
        %v1743 = vpack.c.bf16 %v1731, %v1729
        %v1744 = vpack.c.bf16 %v1732, %v1730
        %v1745 = vpack.c.bf16 %v1735, %v1733
        %v1746 = vpack.c.bf16 %v1736, %v1734
        %v1747 = vpack.c.bf16 %v1739, %v1737
        %v1748 = vpack.c.bf16 %v1740, %v1738
        %v1749 = vld [vmem:[#allocation13] sm:$0xf]
        %v1750 = vld [vmem:[#allocation13 + $0x4] sm:$0xf]
        %v1751 = vld [vmem:[#allocation13 + $0x8] sm:$0xf]
        %v1752 = vld [vmem:[#allocation13 + $0xc] sm:$0xf]
        %v1753 = vld [vmem:[#allocation13 + $0x10] sm:$0xf]
        %v1754 = vld [vmem:[#allocation13 + $0x14] sm:$0xf]
        %v1755 = vld [vmem:[#allocation13 + $0x18] sm:$0xf]
        %v1756 = vld [vmem:[#allocation13 + $0x1c] sm:$0xf]
        %v1757 = vld [vmem:[#allocation13 + $0x20] sm:$0xf]
        %v1758 = vld [vmem:[#allocation13 + $0x24] sm:$0xf]
        %v1759 = vld [vmem:[#allocation13 + $0x28] sm:$0xf]
        %v1760 = vld [vmem:[#allocation13 + $0x2c] sm:$0xf]
        %v1761 = vld [vmem:[#allocation13 + $0x30] sm:$0xf]
        %v1762 = vld [vmem:[#allocation13 + $0x34] sm:$0xf]
        %v1763 = vld [vmem:[#allocation13 + $0x38] sm:$0xf]
        %v1764 = vld [vmem:[#allocation13 + $0x3c] sm:$0xf]
        %v1765 = vld [vmem:[#allocation13 + $0x40] sm:$0xf]
        %v1766 = vld [vmem:[#allocation13 + $0x44] sm:$0xf]
        %v1767 = vld [vmem:[#allocation13 + $0x48] sm:$0xf]
        %v1768 = vld [vmem:[#allocation13 + $0x4c] sm:$0xf]
        %v1769 = vld [vmem:[#allocation13 + $0x50] sm:$0xf]
        %v1770 = vld [vmem:[#allocation13 + $0x54] sm:$0xf]
        %v1771 = vld [vmem:[#allocation13 + $0x58] sm:$0xf]
        %v1772 = vld [vmem:[#allocation13 + $0x5c] sm:$0xf]
        %v1773 = vld [vmem:[#allocation13 + $0x60] sm:$0xf]
        %v1774 = vld [vmem:[#allocation13 + $0x64] sm:$0xf]
        %v1775 = vld [vmem:[#allocation13 + $0x68] sm:$0xf]
        %v1776 = vld [vmem:[#allocation13 + $0x6c] sm:$0xf]
        %v1777 = vld [vmem:[#allocation13 + $0x70] sm:$0xf]
        %v1778 = vld [vmem:[#allocation13 + $0x74] sm:$0xf]
        %v1779 = vld [vmem:[#allocation13 + $0x78] sm:$0xf]
        %v1780 = vld [vmem:[#allocation13 + $0x7c] sm:$0xf]
        %v1781 = vld [vmem:[%s10] sm:$0x1]
        %v1783 = vlaneseq
        %v1784 = vshrl.u32 %v1783, 7
        %v1785 = vsub.s32 0, %v1784
        %v1786 = vrot.slane %v1781, %v1785
        %v1820 = vunpack.c.l.b16 %v1749
        %v1821 = vunpack.c.l.b16 %v1750
        %v1822 = vunpack.c.l.b16 %v1751
        %v1823 = vunpack.c.l.b16 %v1752
        %v1824 = vunpack.c.l.b16 %v1753
        %v1825 = vunpack.c.l.b16 %v1754
        %v1826 = vunpack.c.l.b16 %v1755
        %v1827 = vunpack.c.l.b16 %v1756
        %v1828 = vunpack.c.l.b16 %v1757
        %v1829 = vunpack.c.l.b16 %v1758
        %v1830 = vunpack.c.l.b16 %v1759
        %v1831 = vunpack.c.l.b16 %v1760
        %v1832 = vunpack.c.l.b16 %v1761
        %v1833 = vunpack.c.l.b16 %v1762
        %v1834 = vunpack.c.l.b16 %v1763
        %v1835 = vunpack.c.l.b16 %v1764
        %v1836 = vunpack.c.l.b16 %v1765
        %v1837 = vunpack.c.l.b16 %v1766
        %v1838 = vunpack.c.l.b16 %v1767
        %v1839 = vunpack.c.l.b16 %v1768
        %v1840 = vunpack.c.l.b16 %v1769
        %v1841 = vunpack.c.l.b16 %v1770
        %v1842 = vunpack.c.l.b16 %v1771
        %v1843 = vunpack.c.l.b16 %v1772
        %v1844 = vunpack.c.l.b16 %v1773
        %v1845 = vunpack.c.l.b16 %v1774
        %v1846 = vunpack.c.l.b16 %v1775
        %v1847 = vunpack.c.l.b16 %v1776
        %v1848 = vunpack.c.l.b16 %v1777
        %v1849 = vunpack.c.l.b16 %v1778
        %v1850 = vunpack.c.l.b16 %v1779
        %v1851 = vunpack.c.l.b16 %v1780
        %v1852 = vpack.c.b16 %v1821, %v1820
        %v1853 = vpack.c.b16 %v1823, %v1822
        %v1854 = vpack.c.b16 %v1825, %v1824
        %v1855 = vpack.c.b16 %v1827, %v1826
        %v1856 = vpack.c.b16 %v1829, %v1828
        %v1857 = vpack.c.b16 %v1831, %v1830
        %v1858 = vpack.c.b16 %v1833, %v1832
        %v1859 = vpack.c.b16 %v1835, %v1834
        %v1860 = vpack.c.b16 %v1837, %v1836
        %v1861 = vpack.c.b16 %v1839, %v1838
        %v1862 = vpack.c.b16 %v1841, %v1840
        %v1863 = vpack.c.b16 %v1843, %v1842
        %v1864 = vpack.c.b16 %v1845, %v1844
        %v1865 = vpack.c.b16 %v1847, %v1846
        %v1866 = vpack.c.b16 %v1849, %v1848
        %v1867 = vpack.c.b16 %v1851, %v1850
        %1884 = vmatprep.subr.bf16.mxu0 0
        %1885 = vmatpush1.bf16.msra.mxu0 %v1852
        %1886 = vmatprep.subr.bf16.mxu0 0
        %1887 = vmatpush1.bf16.msra.mxu0 %v1853
        %1888 = vmatprep.subr.bf16.mxu0 0
        %1889 = vmatpush1.bf16.msra.mxu0 %v1854
        %1890 = vmatprep.subr.bf16.mxu0 0
        %1891 = vmatpush1.bf16.msra.mxu0 %v1855
        %1892 = vmatprep.subr.bf16.mxu0 0
        %1893 = vmatpush1.bf16.msra.mxu0 %v1856
        %1894 = vmatprep.subr.bf16.mxu0 0
        %1895 = vmatpush1.bf16.msra.mxu0 %v1857
        %1896 = vmatprep.subr.bf16.mxu0 0
        %1897 = vmatpush1.bf16.msra.mxu0 %v1858
        %1898 = vmatprep.subr.bf16.mxu0 0
        %1899 = vmatpush1.bf16.msra.mxu0 %v1859
        %1900 = vmatprep.subr.bf16.mxu0 0
        %1901 = vmatpush1.bf16.msra.mxu0 %v1860
        %1902 = vmatprep.subr.bf16.mxu0 0
        %1903 = vmatpush1.bf16.msra.mxu0 %v1861
        %1904 = vmatprep.subr.bf16.mxu0 0
        %1905 = vmatpush1.bf16.msra.mxu0 %v1862
        %1906 = vmatprep.subr.bf16.mxu0 0
        %1907 = vmatpush1.bf16.msra.mxu0 %v1863
        %1908 = vmatprep.subr.bf16.mxu0 0
        %1909 = vmatpush1.bf16.msra.mxu0 %v1864
        %1910 = vmatprep.subr.bf16.mxu0 0
        %1911 = vmatpush1.bf16.msra.mxu0 %v1865
        %1912 = vmatprep.subr.bf16.mxu0 0
        %1913 = vmatpush1.bf16.msra.mxu0 %v1866
        %1914 = vmatprep.subr.bf16.mxu0 0
        %1915 = vmatpush1.bf16.msra.mxu0 %v1867
        %1916 = vmatprep.mubr.bf16.mxu0 %v1742
        %1917 = vmatmul.mubr.bf16.gmra.mrb[0].mxu0 %v1741
        %v1918 = vpop.f32.mrb[0].mxu0
        %v1919 = vadd.f32 %v1786, %v1918
        %v1920 = vpop.f32.mrb[0].mxu0
        %v1921 = vpop.f32.mrb[0].mxu0
        %v1922 = vadd.f32 %v1786, %v1921
        %v1923 = vpop.f32.mrb[0].mxu0
        %1924 = vmatprep.mubr.bf16.mxu0 %v1744
        %1925 = vmatmul.mubr.bf16.gmra.mrb[0].mxu0 %v1743
        %v1926 = vpop.f32.mrb[0].mxu0
        %v1927 = vadd.f32 %v1786, %v1926
        %v1928 = vpop.f32.mrb[0].mxu0
        %v1929 = vpop.f32.mrb[0].mxu0
        %v1930 = vadd.f32 %v1786, %v1929
        %v1931 = vpop.f32.mrb[0].mxu0
        %1932 = vmatprep.mubr.bf16.mxu0 %v1746
        %1933 = vmatmul.mubr.bf16.gmra.mrb[0].mxu0 %v1745
        %v1934 = vpop.f32.mrb[0].mxu0
        %v1935 = vadd.f32 %v1786, %v1934
        %v1936 = vpop.f32.mrb[0].mxu0
        %v1937 = vpop.f32.mrb[0].mxu0
        %v1938 = vadd.f32 %v1786, %v1937
        %v1939 = vpop.f32.mrb[0].mxu0
        %1940 = vmatprep.mubr.bf16.mxu0 %v1748
        %1941 = vmatmul.mubr.bf16.gmra.mrb[0].mxu0 %v1747
        %v1942 = vpop.f32.mrb[0].mxu0
        %v1943 = vadd.f32 %v1786, %v1942
        %v1944 = vpop.f32.mrb[0].mxu0
        %v1945 = vpop.f32.mrb[0].mxu0
        %v1946 = vadd.f32 %v1786, %v1945
        %v1947 = vpop.f32.mrb[0].mxu0
        %1948 = vdwg.mxu0
        %v1949 = vadd.f32 %v1919, %v1116
        %v1950 = vadd.f32 %v1922, %v1117
        %v1951 = vadd.f32 %v1927, %v1118
        %v1952 = vadd.f32 %v1930, %v1119
        %v1953 = vadd.f32 %v1935, %v1120
        %v1954 = vadd.f32 %v1938, %v1121
        %v1955 = vadd.f32 %v1943, %v1122
        %v1956 = vadd.f32 %v1946, %v1123
        %1957 = vst [vmem:[%s539] sm:$0xff] %v1949
        %1958 = vst [vmem:[%s539 + $0x8] sm:$0xff] %v1950
        %1959 = vst [vmem:[%s539 + $0x10] sm:$0xff] %v1951
        %1960 = vst [vmem:[%s539 + $0x18] sm:$0xff] %v1952
        %1961 = vst [vmem:[%s539 + $0x20] sm:$0xff] %v1953
        %1962 = vst [vmem:[%s539 + $0x28] sm:$0xff] %v1954
        %1963 = vst [vmem:[%s539 + $0x30] sm:$0xff] %v1955
        %1964 = vst [vmem:[%s539 + $0x38] sm:$0xff] %v1956
        %s1965 = sand.u32 %s287, 1
        %s1966 = scalar_lea.sflag [#allocation4], %s1965
        %s1967 = sand.u32 %s287, 1
        %s1968 = smul.addr %s1967, 64
        %s1969 = scalar_lea.vmem [#allocation14], %s1968
        // Predicated region
        $region93: #{tpu_custom_call.1} parent=63 // pred_check
          %p1970 = pneg %p297
        $region94: #{tpu_custom_call.1} parent=63 // pred_check_branch
          %1972 = sbr.rel (%p1970) target = $region96
        $region95: #{tpu_custom_call.1} parent=63 // pred_region
          %s1973 = smul.u32 8, %s33
          %s1975 = ssub.s32 1024, 1024
          %1976 = vsyncadd %s1966, %s1975
          %s1977 = smul.addr %s1973, 128
          %s1978 = scalar_lea.hbm %s11, %s1977
          %s1979 = sshll.u32 %s1969, 4
          %s1980 = int_to_ptr.vmem [resolvable:$true] %s1979
          %1985 = dma.vmem_to_hbm [thread:$0]  %s1980, 1024, %s1978, %s1966, 128, 128, 8
        $region96: #{tpu_custom_call.1} parent=63 // pred_fallthru
          _
      $region64: #{tpu_custom_call.1} parent=5 // pred_fallthru
        _
      %p1986 = scmp.le.s32.totalorder 2, %s28
      // Predicated region
      $region97: #{tpu_custom_call.1} parent=5 // pred_check
        %p1987 = pneg %p1986
      $region98: #{tpu_custom_call.1} parent=5 // pred_check_branch
        %1989 = sbr.rel (%p1987) target = $region100
      $region99: #{tpu_custom_call.1} parent=5 // pred_region
        %s1990 = ssub.s32 %s28, 2
        // Predicated region
        $region101: #{tpu_custom_call.1} parent=99 // pred_check
          %p1991 = pneg %p303
        $region102: #{tpu_custom_call.1} parent=99 // pred_check_branch
          %1993 = sbr.rel (%p1991) target = $region104
        $region103: #{tpu_custom_call.1} parent=99 // pred_region
          %s1994 = sand.u32 %s288, 1
          %s1995 = scalar_lea.sflag [#allocation4], %s1994
          %s1996 = sand.u32 %s288, 1
          %s1997 = smul.addr %s1996, 64
          %s1998 = scalar_lea.vmem [#allocation14], %s1997
          %1999 = dma.done %s1995, 1024
        $region104: #{tpu_custom_call.1} parent=99 // pred_fallthru
          _
      $region100: #{tpu_custom_call.1} parent=5 // pred_fallthru
        _
    $region6: #{tpu_custom_call.1} parent=1 // loop_footer
      %s32 = sadd.s32 1, %s28
    $region7: #{tpu_custom_call.1} parent=1 // loop_footer_branch
      %27 = sbr.rel target = $region3
    $region8: #{tpu_custom_call.1} parent=1 // loop_exit
      _
    %2000 = vsyncpa [#allocation3], 1
    %s2001 = scalar_lea.sflag [#allocation3], 1
    %2002 = vsyncpa %s2001, 1
    %2003 = vsyncpa [#allocation6], 1
    %s2004 = scalar_lea.sflag [#allocation6], 1
    %2005 = vsyncpa %s2004, 1
    %2006 = vsyncpa [#allocation9], 1
    %2007 = vsyncpa [#allocation12], 1
    %2008 = vsyncpa [#allocation4], 1
    %s2009 = scalar_lea.sflag [#allocation4], 1
    %2010 = vsyncpa %s2009, 1

</llo_original>
